<compile_context>
chip_gen: v5e
topology: v5e:2x2
jax: 0.10.0
libtpu: 0.0.40
codegen_flags: <defaults>
</compile_context>

<pallas_src>
import functools

import jax
import jax.numpy as jnp
from jax.experimental import pallas as pl
from jax.experimental.pallas import tpu as pltpu  # noqa: F401 (TPU backend)

PAD = "<PAD>"
START_TAG = "<START>"
STOP_TAG = "<STOP>"


def crf_forward_kernel(h_ref, mask_ref, trans_ref, out_ref, *, start_idx, stop_idx):
    # h_ref:     (B, T, N)  emission scores (VMEM resident)
    # mask_ref:  (B, T)     0/1 mask        (VMEM resident)
    # trans_ref: (N, N)     transitions, trans[i, j] = score(j -> i)
    # out_ref:   (B, 1)     final log partition function
    B, T, N = h_ref.shape

    h_all = h_ref[...]        # (B, T, N) -- single load, sliced statically below
    mask_all = mask_ref[...]  # (B, T)
    trans = trans_ref[...]    # (N, N)    -- loop invariant

    # score[b, j] init: 0 at START tag, -10000 elsewhere.
    col = jax.lax.broadcasted_iota(jnp.int32, (B, N), 1)
    score = jnp.where(col == start_idx, 0.0, -10000.0).astype(jnp.float32)

    # Statically unrolled recurrence over time (T is a trace-time constant, so
    # every slice below is static -> no dynamic indexing in the hot loop).
    for t in range(T):
        emit_t = h_all[:, t, :]            # (B, N)
        mask_t = mask_all[:, t:t + 1]      # (B, 1)
        # x[b, i, j] = score[b, j] + trans[i, j]   (emission hoisted out)
        x = score[:, None, :] + trans[None, :, :]                  # (B, N, N)
        m = jnp.max(x, axis=-1)                                    # (B, N)
        lse = m + jnp.log(jnp.sum(jnp.exp(x - m[:, :, None]), axis=-1))
        new = lse + emit_t                                         # (B, N)
        score = jnp.where(mask_t != 0.0, new, score)

    # Final STOP-transition log-sum-exp.
    stop_row = trans[stop_idx:stop_idx + 1, :]                     # (1, N)
    fin = score + stop_row                                         # (B, N)
    mf = jnp.max(fin, axis=-1, keepdims=True)                      # (B, 1)
    out_ref[...] = mf + jnp.log(jnp.sum(jnp.exp(fin - mf), axis=-1, keepdims=True))


def crf_forward(h, mask, trans, start_idx, stop_idx):
    """h: (B, T, N) float32, mask: (B, T) float32 of 0/1, trans: (N, N)."""
    B, T, N = h.shape
    kernel = functools.partial(crf_forward_kernel,
                               start_idx=start_idx, stop_idx=stop_idx)
    # TODO(synk): for realistic tag counts (N >= ~128) switch the per-step
    # recurrence to a max-shifted exp(score) @ exp(trans).T matmul (MXU) and
    # tile the batch axis (parallel grid axis -> 2 TCs on v7x, re-derive
    # tiling for 64 MiB VMEM); at N=8 the broadcast path is cheaper.
    out = pl.pallas_call(
        kernel,
        out_shape=jax.ShapeDtypeStruct((B, 1), jnp.float32),
    )(h.astype(jnp.float32), mask.astype(jnp.float32), trans.astype(jnp.float32))
    return out[:, 0]


def crf_forward_ref(h, mask, trans, start_idx, stop_idx):
    """Pure-JAX mirror of the PyTorch crf.forward for validation."""
    B, T, N = h.shape
    score = jnp.full((B, N), -10000.0, jnp.float32).at[:, start_idx].set(0.0)
    for t in range(T):
        mask_t = mask[:, t][:, None]
        x = score[:, None, :] + h[:, t][:, :, None] + trans[None, :, :]
        m = jnp.max(x, -1)
        lse = m + jnp.log(jnp.sum(jnp.exp(x - m[..., None]), -1))
        score = lse * mask_t + score * (1.0 - mask_t)
    fin = score + trans[stop_idx][None, :]
    m = jnp.max(fin, -1)
    return m + jnp.log(jnp.sum(jnp.exp(fin - m[:, None]), -1))


def make_trans(key, tag2int, num_tags):
    """Deterministic replication of crf.__init__ parameter setup."""
    trans = jax.random.normal(key, (num_tags, num_tags), dtype=jnp.float32)
    s, e, p = tag2int[START_TAG], tag2int[STOP_TAG], tag2int[PAD]
    trans = trans.at[s, :].set(-10000.0)
    trans = trans.at[:, e].set(-10000.0)
    trans = trans.at[:, p].set(-10000.0)
    trans = trans.at[p, :].set(-10000.0)
    trans = trans.at[p, e].set(0.0)
    trans = trans.at[p, p].set(0.0)
    return trans


if __name__ == "__main__":
    tag_dict = [PAD, START_TAG, STOP_TAG, "B-PER", "I-PER", "B-LOC", "I-LOC", "O"]
    tag2int = {t: i for i, t in enumerate(tag_dict)}
    num_tags = len(tag_dict)          # 8

    B, T = 8, 8
    key = jax.random.PRNGKey(0)
    k_trans, k_h = jax.random.split(key)

    trans = make_trans(k_trans, tag2int, num_tags)
    h = jax.random.normal(k_h, (B, T, num_tags), dtype=jnp.float32)

    lengths = jnp.array([8, 5, 3, 6, 8, 1, 4, 7], dtype=jnp.int32)
    mask = (jnp.arange(T)[None, :] < lengths[:, None]).astype(jnp.float32)  # (B, T)

    out = crf_forward(h, mask, trans, tag2int[START_TAG], tag2int[STOP_TAG])
    out = jax.block_until_ready(out)

    ref = crf_forward_ref(h, mask, trans, tag2int[START_TAG], tag2int[STOP_TAG])
    assert out.shape == (B,)
    assert jnp.allclose(out, ref, rtol=1e-4, atol=1e-4), (out, ref)

    print("KERNEL_OK")
</pallas_src>

<mosaic_0001>
module attributes {stable_mosaic.version = 11 : i64} {
  func.func @crf_forward_kernel(%arg0: memref<8x8x8xf32, #tpu.memory_space<vmem>>, %arg1: memref<8x8xf32, #tpu.memory_space<vmem>>, %arg2: memref<8x8xf32, #tpu.memory_space<vmem>>, %arg3: memref<8x1xf32, #tpu.memory_space<vmem>>) attributes {dimension_semantics = [], scalar_prefetch = 0 : i64, scratch_operands = 0 : i64, tpu.core_type = #tpu.core_type<tc>} {
    %c0 = arith.constant 0 : index
    %c0_0 = arith.constant 0 : index
    %c0_1 = arith.constant 0 : index
    %0 = vector.load %arg0[%c0, %c0_0, %c0_1] : memref<8x8x8xf32, #tpu.memory_space<vmem>>, vector<8x8x8xf32>
    %c0_2 = arith.constant 0 : index
    %c0_3 = arith.constant 0 : index
    %1 = vector.load %arg1[%c0_2, %c0_3] : memref<8x8xf32, #tpu.memory_space<vmem>>, vector<8x8xf32>
    %c0_4 = arith.constant 0 : index
    %c0_5 = arith.constant 0 : index
    %2 = vector.load %arg2[%c0_4, %c0_5] : memref<8x8xf32, #tpu.memory_space<vmem>>, vector<8x8xf32>
    %3 = tpu.iota {dimensions = array<i32: 1>} : vector<8x8xi32>
    %c1_i32 = arith.constant 1 : i32
    %4 = vector.broadcast %c1_i32 : i32 to vector<8x8xi32>
    %5 = arith.cmpi eq, %3, %4 : vector<8x8xi32>
    %cst = arith.constant 0.000000e+00 : f32
    %cst_6 = arith.constant -1.000000e+04 : f32
    %6 = vector.broadcast %cst : f32 to vector<8x8xf32>
    %7 = vector.broadcast %cst_6 : f32 to vector<8x8xf32>
    %8 = arith.select %5, %6, %7 : vector<8x8xi1>, vector<8x8xf32>
    %9 = vector.extract_strided_slice %0 {offsets = [0, 0, 0], sizes = [8, 1, 8], strides = [1, 1, 1]} : vector<8x8x8xf32> to vector<8x1x8xf32>
    %10 = vector.shape_cast %9 : vector<8x1x8xf32> to vector<8x8xf32>
    %11 = vector.extract_strided_slice %1 {offsets = [0, 0], sizes = [8, 1], strides = [1, 1]} : vector<8x8xf32> to vector<8x1xf32>
    %12 = vector.shape_cast %8 : vector<8x8xf32> to vector<8x1x8xf32>
    %13 = vector.shape_cast %2 : vector<8x8xf32> to vector<1x8x8xf32>
    %14 = vector.broadcast %12 : vector<8x1x8xf32> to vector<8x8x8xf32>
    %15 = vector.broadcast %13 : vector<1x8x8xf32> to vector<8x8x8xf32>
    %16 = arith.addf %14, %15 : vector<8x8x8xf32>
    %cst_7 = arith.constant dense<0xFF800000> : vector<8x8xf32>
    %17 = vector.multi_reduction <maximumf>, %16, %cst_7 [2] : vector<8x8x8xf32> to vector<8x8xf32>
    %18 = vector.shape_cast %17 : vector<8x8xf32> to vector<8x8x1xf32>
    %19 = vector.broadcast %18 : vector<8x8x1xf32> to vector<8x8x8xf32>
    %20 = arith.subf %16, %19 : vector<8x8x8xf32>
    %21 = math.exp %20 : vector<8x8x8xf32>
    %cst_8 = arith.constant dense<0.000000e+00> : vector<8x8xf32>
    %22 = vector.multi_reduction <add>, %21, %cst_8 [2] : vector<8x8x8xf32> to vector<8x8xf32>
    %23 = math.log %22 : vector<8x8xf32>
    %24 = arith.addf %17, %23 : vector<8x8xf32>
    %25 = arith.addf %24, %10 : vector<8x8xf32>
    %cst_9 = arith.constant 0.000000e+00 : f32
    %26 = vector.broadcast %cst_9 : f32 to vector<8x1xf32>
    %27 = arith.cmpf one, %11, %26 : vector<8x1xf32>
    %28 = vector.shape_cast %27 : vector<8x1xi1> to vector<8x1xi1>
    %29 = vector.broadcast %28 : vector<8x1xi1> to vector<8x8xi1>
    %30 = arith.select %29, %25, %8 : vector<8x8xi1>, vector<8x8xf32>
    %31 = vector.extract_strided_slice %0 {offsets = [0, 1, 0], sizes = [8, 1, 8], strides = [1, 1, 1]} : vector<8x8x8xf32> to vector<8x1x8xf32>
    %32 = vector.shape_cast %31 : vector<8x1x8xf32> to vector<8x8xf32>
    %33 = vector.extract_strided_slice %1 {offsets = [0, 1], sizes = [8, 1], strides = [1, 1]} : vector<8x8xf32> to vector<8x1xf32>
    %34 = vector.shape_cast %30 : vector<8x8xf32> to vector<8x1x8xf32>
    %35 = vector.shape_cast %2 : vector<8x8xf32> to vector<1x8x8xf32>
    %36 = vector.broadcast %34 : vector<8x1x8xf32> to vector<8x8x8xf32>
    %37 = vector.broadcast %35 : vector<1x8x8xf32> to vector<8x8x8xf32>
    %38 = arith.addf %36, %37 : vector<8x8x8xf32>
    %cst_10 = arith.constant dense<0xFF800000> : vector<8x8xf32>
    %39 = vector.multi_reduction <maximumf>, %38, %cst_10 [2] : vector<8x8x8xf32> to vector<8x8xf32>
    %40 = vector.shape_cast %39 : vector<8x8xf32> to vector<8x8x1xf32>
    %41 = vector.broadcast %40 : vector<8x8x1xf32> to vector<8x8x8xf32>
    %42 = arith.subf %38, %41 : vector<8x8x8xf32>
    %43 = math.exp %42 : vector<8x8x8xf32>
    %cst_11 = arith.constant dense<0.000000e+00> : vector<8x8xf32>
    %44 = vector.multi_reduction <add>, %43, %cst_11 [2] : vector<8x8x8xf32> to vector<8x8xf32>
    %45 = math.log %44 : vector<8x8xf32>
    %46 = arith.addf %39, %45 : vector<8x8xf32>
    %47 = arith.addf %46, %32 : vector<8x8xf32>
    %cst_12 = arith.constant 0.000000e+00 : f32
    %48 = vector.broadcast %cst_12 : f32 to vector<8x1xf32>
    %49 = arith.cmpf one, %33, %48 : vector<8x1xf32>
    %50 = vector.shape_cast %49 : vector<8x1xi1> to vector<8x1xi1>
    %51 = vector.broadcast %50 : vector<8x1xi1> to vector<8x8xi1>
    %52 = arith.select %51, %47, %30 : vector<8x8xi1>, vector<8x8xf32>
    %53 = vector.extract_strided_slice %0 {offsets = [0, 2, 0], sizes = [8, 1, 8], strides = [1, 1, 1]} : vector<8x8x8xf32> to vector<8x1x8xf32>
    %54 = vector.shape_cast %53 : vector<8x1x8xf32> to vector<8x8xf32>
    %55 = vector.extract_strided_slice %1 {offsets = [0, 2], sizes = [8, 1], strides = [1, 1]} : vector<8x8xf32> to vector<8x1xf32>
    %56 = vector.shape_cast %52 : vector<8x8xf32> to vector<8x1x8xf32>
    %57 = vector.shape_cast %2 : vector<8x8xf32> to vector<1x8x8xf32>
    %58 = vector.broadcast %56 : vector<8x1x8xf32> to vector<8x8x8xf32>
    %59 = vector.broadcast %57 : vector<1x8x8xf32> to vector<8x8x8xf32>
    %60 = arith.addf %58, %59 : vector<8x8x8xf32>
    %cst_13 = arith.constant dense<0xFF800000> : vector<8x8xf32>
    %61 = vector.multi_reduction <maximumf>, %60, %cst_13 [2] : vector<8x8x8xf32> to vector<8x8xf32>
    %62 = vector.shape_cast %61 : vector<8x8xf32> to vector<8x8x1xf32>
    %63 = vector.broadcast %62 : vector<8x8x1xf32> to vector<8x8x8xf32>
    %64 = arith.subf %60, %63 : vector<8x8x8xf32>
    %65 = math.exp %64 : vector<8x8x8xf32>
    %cst_14 = arith.constant dense<0.000000e+00> : vector<8x8xf32>
    %66 = vector.multi_reduction <add>, %65, %cst_14 [2] : vector<8x8x8xf32> to vector<8x8xf32>
    %67 = math.log %66 : vector<8x8xf32>
    %68 = arith.addf %61, %67 : vector<8x8xf32>
    %69 = arith.addf %68, %54 : vector<8x8xf32>
    %cst_15 = arith.constant 0.000000e+00 : f32
    %70 = vector.broadcast %cst_15 : f32 to vector<8x1xf32>
    %71 = arith.cmpf one, %55, %70 : vector<8x1xf32>
    %72 = vector.shape_cast %71 : vector<8x1xi1> to vector<8x1xi1>
    %73 = vector.broadcast %72 : vector<8x1xi1> to vector<8x8xi1>
    %74 = arith.select %73, %69, %52 : vector<8x8xi1>, vector<8x8xf32>
    %75 = vector.extract_strided_slice %0 {offsets = [0, 3, 0], sizes = [8, 1, 8], strides = [1, 1, 1]} : vector<8x8x8xf32> to vector<8x1x8xf32>
    %76 = vector.shape_cast %75 : vector<8x1x8xf32> to vector<8x8xf32>
    %77 = vector.extract_strided_slice %1 {offsets = [0, 3], sizes = [8, 1], strides = [1, 1]} : vector<8x8xf32> to vector<8x1xf32>
    %78 = vector.shape_cast %74 : vector<8x8xf32> to vector<8x1x8xf32>
    %79 = vector.shape_cast %2 : vector<8x8xf32> to vector<1x8x8xf32>
    %80 = vector.broadcast %78 : vector<8x1x8xf32> to vector<8x8x8xf32>
    %81 = vector.broadcast %79 : vector<1x8x8xf32> to vector<8x8x8xf32>
    %82 = arith.addf %80, %81 : vector<8x8x8xf32>
    %cst_16 = arith.constant dense<0xFF800000> : vector<8x8xf32>
    %83 = vector.multi_reduction <maximumf>, %82, %cst_16 [2] : vector<8x8x8xf32> to vector<8x8xf32>
    %84 = vector.shape_cast %83 : vector<8x8xf32> to vector<8x8x1xf32>
    %85 = vector.broadcast %84 : vector<8x8x1xf32> to vector<8x8x8xf32>
    %86 = arith.subf %82, %85 : vector<8x8x8xf32>
    %87 = math.exp %86 : vector<8x8x8xf32>
    %cst_17 = arith.constant dense<0.000000e+00> : vector<8x8xf32>
    %88 = vector.multi_reduction <add>, %87, %cst_17 [2] : vector<8x8x8xf32> to vector<8x8xf32>
    %89 = math.log %88 : vector<8x8xf32>
    %90 = arith.addf %83, %89 : vector<8x8xf32>
    %91 = arith.addf %90, %76 : vector<8x8xf32>
    %cst_18 = arith.constant 0.000000e+00 : f32
    %92 = vector.broadcast %cst_18 : f32 to vector<8x1xf32>
    %93 = arith.cmpf one, %77, %92 : vector<8x1xf32>
    %94 = vector.shape_cast %93 : vector<8x1xi1> to vector<8x1xi1>
    %95 = vector.broadcast %94 : vector<8x1xi1> to vector<8x8xi1>
    %96 = arith.select %95, %91, %74 : vector<8x8xi1>, vector<8x8xf32>
    %97 = vector.extract_strided_slice %0 {offsets = [0, 4, 0], sizes = [8, 1, 8], strides = [1, 1, 1]} : vector<8x8x8xf32> to vector<8x1x8xf32>
    %98 = vector.shape_cast %97 : vector<8x1x8xf32> to vector<8x8xf32>
    %99 = vector.extract_strided_slice %1 {offsets = [0, 4], sizes = [8, 1], strides = [1, 1]} : vector<8x8xf32> to vector<8x1xf32>
    %100 = vector.shape_cast %96 : vector<8x8xf32> to vector<8x1x8xf32>
    %101 = vector.shape_cast %2 : vector<8x8xf32> to vector<1x8x8xf32>
    %102 = vector.broadcast %100 : vector<8x1x8xf32> to vector<8x8x8xf32>
    %103 = vector.broadcast %101 : vector<1x8x8xf32> to vector<8x8x8xf32>
    %104 = arith.addf %102, %103 : vector<8x8x8xf32>
    %cst_19 = arith.constant dense<0xFF800000> : vector<8x8xf32>
    %105 = vector.multi_reduction <maximumf>, %104, %cst_19 [2] : vector<8x8x8xf32> to vector<8x8xf32>
    %106 = vector.shape_cast %105 : vector<8x8xf32> to vector<8x8x1xf32>
    %107 = vector.broadcast %106 : vector<8x8x1xf32> to vector<8x8x8xf32>
    %108 = arith.subf %104, %107 : vector<8x8x8xf32>
    %109 = math.exp %108 : vector<8x8x8xf32>
    %cst_20 = arith.constant dense<0.000000e+00> : vector<8x8xf32>
    %110 = vector.multi_reduction <add>, %109, %cst_20 [2] : vector<8x8x8xf32> to vector<8x8xf32>
    %111 = math.log %110 : vector<8x8xf32>
    %112 = arith.addf %105, %111 : vector<8x8xf32>
    %113 = arith.addf %112, %98 : vector<8x8xf32>
    %cst_21 = arith.constant 0.000000e+00 : f32
    %114 = vector.broadcast %cst_21 : f32 to vector<8x1xf32>
    %115 = arith.cmpf one, %99, %114 : vector<8x1xf32>
    %116 = vector.shape_cast %115 : vector<8x1xi1> to vector<8x1xi1>
    %117 = vector.broadcast %116 : vector<8x1xi1> to vector<8x8xi1>
    %118 = arith.select %117, %113, %96 : vector<8x8xi1>, vector<8x8xf32>
    %119 = vector.extract_strided_slice %0 {offsets = [0, 5, 0], sizes = [8, 1, 8], strides = [1, 1, 1]} : vector<8x8x8xf32> to vector<8x1x8xf32>
    %120 = vector.shape_cast %119 : vector<8x1x8xf32> to vector<8x8xf32>
    %121 = vector.extract_strided_slice %1 {offsets = [0, 5], sizes = [8, 1], strides = [1, 1]} : vector<8x8xf32> to vector<8x1xf32>
    %122 = vector.shape_cast %118 : vector<8x8xf32> to vector<8x1x8xf32>
    %123 = vector.shape_cast %2 : vector<8x8xf32> to vector<1x8x8xf32>
    %124 = vector.broadcast %122 : vector<8x1x8xf32> to vector<8x8x8xf32>
    %125 = vector.broadcast %123 : vector<1x8x8xf32> to vector<8x8x8xf32>
    %126 = arith.addf %124, %125 : vector<8x8x8xf32>
    %cst_22 = arith.constant dense<0xFF800000> : vector<8x8xf32>
    %127 = vector.multi_reduction <maximumf>, %126, %cst_22 [2] : vector<8x8x8xf32> to vector<8x8xf32>
    %128 = vector.shape_cast %127 : vector<8x8xf32> to vector<8x8x1xf32>
    %129 = vector.broadcast %128 : vector<8x8x1xf32> to vector<8x8x8xf32>
    %130 = arith.subf %126, %129 : vector<8x8x8xf32>
    %131 = math.exp %130 : vector<8x8x8xf32>
    %cst_23 = arith.constant dense<0.000000e+00> : vector<8x8xf32>
    %132 = vector.multi_reduction <add>, %131, %cst_23 [2] : vector<8x8x8xf32> to vector<8x8xf32>
    %133 = math.log %132 : vector<8x8xf32>
    %134 = arith.addf %127, %133 : vector<8x8xf32>
    %135 = arith.addf %134, %120 : vector<8x8xf32>
    %cst_24 = arith.constant 0.000000e+00 : f32
    %136 = vector.broadcast %cst_24 : f32 to vector<8x1xf32>
    %137 = arith.cmpf one, %121, %136 : vector<8x1xf32>
    %138 = vector.shape_cast %137 : vector<8x1xi1> to vector<8x1xi1>
    %139 = vector.broadcast %138 : vector<8x1xi1> to vector<8x8xi1>
    %140 = arith.select %139, %135, %118 : vector<8x8xi1>, vector<8x8xf32>
    %141 = vector.extract_strided_slice %0 {offsets = [0, 6, 0], sizes = [8, 1, 8], strides = [1, 1, 1]} : vector<8x8x8xf32> to vector<8x1x8xf32>
    %142 = vector.shape_cast %141 : vector<8x1x8xf32> to vector<8x8xf32>
    %143 = vector.extract_strided_slice %1 {offsets = [0, 6], sizes = [8, 1], strides = [1, 1]} : vector<8x8xf32> to vector<8x1xf32>
    %144 = vector.shape_cast %140 : vector<8x8xf32> to vector<8x1x8xf32>
    %145 = vector.shape_cast %2 : vector<8x8xf32> to vector<1x8x8xf32>
    %146 = vector.broadcast %144 : vector<8x1x8xf32> to vector<8x8x8xf32>
    %147 = vector.broadcast %145 : vector<1x8x8xf32> to vector<8x8x8xf32>
    %148 = arith.addf %146, %147 : vector<8x8x8xf32>
    %cst_25 = arith.constant dense<0xFF800000> : vector<8x8xf32>
    %149 = vector.multi_reduction <maximumf>, %148, %cst_25 [2] : vector<8x8x8xf32> to vector<8x8xf32>
    %150 = vector.shape_cast %149 : vector<8x8xf32> to vector<8x8x1xf32>
    %151 = vector.broadcast %150 : vector<8x8x1xf32> to vector<8x8x8xf32>
    %152 = arith.subf %148, %151 : vector<8x8x8xf32>
    %153 = math.exp %152 : vector<8x8x8xf32>
    %cst_26 = arith.constant dense<0.000000e+00> : vector<8x8xf32>
    %154 = vector.multi_reduction <add>, %153, %cst_26 [2] : vector<8x8x8xf32> to vector<8x8xf32>
    %155 = math.log %154 : vector<8x8xf32>
    %156 = arith.addf %149, %155 : vector<8x8xf32>
    %157 = arith.addf %156, %142 : vector<8x8xf32>
    %cst_27 = arith.constant 0.000000e+00 : f32
    %158 = vector.broadcast %cst_27 : f32 to vector<8x1xf32>
    %159 = arith.cmpf one, %143, %158 : vector<8x1xf32>
    %160 = vector.shape_cast %159 : vector<8x1xi1> to vector<8x1xi1>
    %161 = vector.broadcast %160 : vector<8x1xi1> to vector<8x8xi1>
    %162 = arith.select %161, %157, %140 : vector<8x8xi1>, vector<8x8xf32>
    %163 = vector.extract_strided_slice %0 {offsets = [0, 7, 0], sizes = [8, 1, 8], strides = [1, 1, 1]} : vector<8x8x8xf32> to vector<8x1x8xf32>
    %164 = vector.shape_cast %163 : vector<8x1x8xf32> to vector<8x8xf32>
    %165 = vector.extract_strided_slice %1 {offsets = [0, 7], sizes = [8, 1], strides = [1, 1]} : vector<8x8xf32> to vector<8x1xf32>
    %166 = vector.shape_cast %162 : vector<8x8xf32> to vector<8x1x8xf32>
    %167 = vector.shape_cast %2 : vector<8x8xf32> to vector<1x8x8xf32>
    %168 = vector.broadcast %166 : vector<8x1x8xf32> to vector<8x8x8xf32>
    %169 = vector.broadcast %167 : vector<1x8x8xf32> to vector<8x8x8xf32>
    %170 = arith.addf %168, %169 : vector<8x8x8xf32>
    %cst_28 = arith.constant dense<0xFF800000> : vector<8x8xf32>
    %171 = vector.multi_reduction <maximumf>, %170, %cst_28 [2] : vector<8x8x8xf32> to vector<8x8xf32>
    %172 = vector.shape_cast %171 : vector<8x8xf32> to vector<8x8x1xf32>
    %173 = vector.broadcast %172 : vector<8x8x1xf32> to vector<8x8x8xf32>
    %174 = arith.subf %170, %173 : vector<8x8x8xf32>
    %175 = math.exp %174 : vector<8x8x8xf32>
    %cst_29 = arith.constant dense<0.000000e+00> : vector<8x8xf32>
    %176 = vector.multi_reduction <add>, %175, %cst_29 [2] : vector<8x8x8xf32> to vector<8x8xf32>
    %177 = math.log %176 : vector<8x8xf32>
    %178 = arith.addf %171, %177 : vector<8x8xf32>
    %179 = arith.addf %178, %164 : vector<8x8xf32>
    %cst_30 = arith.constant 0.000000e+00 : f32
    %180 = vector.broadcast %cst_30 : f32 to vector<8x1xf32>
    %181 = arith.cmpf one, %165, %180 : vector<8x1xf32>
    %182 = vector.shape_cast %181 : vector<8x1xi1> to vector<8x1xi1>
    %183 = vector.broadcast %182 : vector<8x1xi1> to vector<8x8xi1>
    %184 = arith.select %183, %179, %162 : vector<8x8xi1>, vector<8x8xf32>
    %185 = vector.extract_strided_slice %2 {offsets = [2, 0], sizes = [1, 8], strides = [1, 1]} : vector<8x8xf32> to vector<1x8xf32>
    %186 = vector.broadcast %185 : vector<1x8xf32> to vector<8x8xf32>
    %187 = arith.addf %184, %186 : vector<8x8xf32>
    %cst_31 = arith.constant dense<0xFF800000> : vector<8xf32>
    %188 = vector.multi_reduction <maximumf>, %187, %cst_31 [1] : vector<8x8xf32> to vector<8xf32>
    %189 = vector.shape_cast %188 : vector<8xf32> to vector<8x1xf32>
    %190 = vector.broadcast %189 : vector<8x1xf32> to vector<8x8xf32>
    %191 = arith.subf %187, %190 : vector<8x8xf32>
    %192 = math.exp %191 : vector<8x8xf32>
    %cst_32 = arith.constant dense<0.000000e+00> : vector<8xf32>
    %193 = vector.multi_reduction <add>, %192, %cst_32 [1] : vector<8x8xf32> to vector<8xf32>
    %194 = vector.shape_cast %193 : vector<8xf32> to vector<8x1xf32>
    %195 = math.log %194 : vector<8x1xf32>
    %196 = arith.addf %189, %195 : vector<8x1xf32>
    %c0_33 = arith.constant 0 : index
    %c0_34 = arith.constant 0 : index
    %197 = vector.load %arg3[%c0_33, %c0_34] : memref<8x1xf32, #tpu.memory_space<vmem>>, vector<8x1xf32>
    tpu.vector_store %arg3[%c0_33, %c0_34], %196 {strides = array<i32>} : memref<8x1xf32, #tpu.memory_space<vmem>>, vector<8x1xf32>,
    return
  }
}

</mosaic_0001>

<llo_original>
// kernel: tpu_custom_call.1
$region0: #{tpu_custom_call.1}
  #allocation0 [shape = 'u32[]', space=smem, size = 0x4, offset = 0x4, fixed_abs, tag = 'smem constant byte address 0x4 - core index']
  #allocation1 [shape = 'u32[72,128]{1,0:T(1,128)}', space=vmem, size = 0x9000, scoped, tag = 'internal scratch']
  %s0 = inlined_call_operand.hbm [shape: f32[8,8,8], index: 0, kind: input, shape index: {}]
  %s1 = inlined_call_operand.hbm [shape: f32[8,8], index: 1, kind: input, shape index: {}]
  %s2 = inlined_call_operand.hbm [shape: f32[8,8], index: 2, kind: input, shape index: {}]
  %s3 = inlined_call_operand.vmem [shape: f32[8,1], index: 3, kind: output, shape index: {}]
  %s4 = sld [smem:[#allocation0]]
  $region34: #{tpu_custom_call.1} parent=0
    _
  %s6 = ssub.s32 1, %s4
  %s7 = scalar_select 0, %s6, %s4
  $region1: #{tpu_custom_call.1} parent=0
    #allocation2 [shape = 'u8[32768]{0}', space=vmem, size = 0x8000, scoped, tag = 'input window, operand 0, single buffered']
    #allocation3 [shape = 's32[1]{0}', space=sflag, size = 0x4, scoped, tag = 'scoped memory for tpu_custom_call.1']
    #allocation4 [shape = 'u8[4096]{0}', space=vmem, size = 0x1000, scoped, tag = 'input window, operand 1, single buffered']
    #allocation5 [shape = 's32[1]{0}', space=sflag, size = 0x4, scoped, tag = 'scoped memory for tpu_custom_call.1']
    #allocation6 [shape = 'u8[4096]{0}', space=vmem, size = 0x1000, scoped, tag = 'input window, operand 2, single buffered']
    %8 = vsyncpa [#allocation3], 0
    %9 = vsyncpa [#allocation5], 0
    // Predicated region
    $region2: #{tpu_custom_call.1} parent=1 // pred_check
      _
    $region3: #{tpu_custom_call.1} parent=1 // pred_check_branch
      %11 = sbr.rel (0) target = $region5
    $region4: #{tpu_custom_call.1} parent=1 // pred_region
      %13 = vsyncadd [#allocation3], 0
      %s14 = sshll.u32 %s0, 4
      %s15 = int_to_ptr.hbm [resolvable:$true] %s14
      %s16 = sshll.u32 [#allocation2], 4
      %s17 = int_to_ptr.vmem [resolvable:$true] %s16
      %22 = dma.hbm_to_vmem [thread:$0]  %s15, 1024, %s17, [#allocation3], 128, 128, 8
    $region5: #{tpu_custom_call.1} parent=1 // pred_fallthru
      _
    // Predicated region
    $region6: #{tpu_custom_call.1} parent=1 // pred_check
      _
    $region7: #{tpu_custom_call.1} parent=1 // pred_check_branch
      %24 = sbr.rel (0) target = $region9
    $region8: #{tpu_custom_call.1} parent=1 // pred_region
      %26 = vsyncadd [#allocation5], 0
      %s28 = sshll.u32 %s1, 4
      %s29 = int_to_ptr.hbm [resolvable:$true] %s28
      %s30 = sshll.u32 [#allocation4], 4
      %s31 = int_to_ptr.vmem [resolvable:$true] %s30
      %33 = dma.hbm_to_vmem [thread:$0]  %s29, 128, %s31, [#allocation5]
    $region9: #{tpu_custom_call.1} parent=1 // pred_fallthru
      _
    // Predicated region
    $region10: #{tpu_custom_call.1} parent=1 // pred_check
      _
    $region11: #{tpu_custom_call.1} parent=1 // pred_check_branch
      %35 = sbr.rel (0) target = $region13
    $region12: #{tpu_custom_call.1} parent=1 // pred_region
      %37 = vsyncadd [#allocation5], 0
      %s39 = sshll.u32 %s2, 4
      %s40 = int_to_ptr.hbm [resolvable:$true] %s39
      %s41 = sshll.u32 [#allocation6], 4
      %s42 = int_to_ptr.vmem [resolvable:$true] %s41
      %44 = dma.hbm_to_vmem [thread:$0]  %s40, 128, %s42, [#allocation5]
    $region13: #{tpu_custom_call.1} parent=1 // pred_fallthru
      _
    // Predicated region
    $region14: #{tpu_custom_call.1} parent=1 // pred_check
      _
    $region15: #{tpu_custom_call.1} parent=1 // pred_check_branch
      %46 = sbr.rel (0) target = $region17
    $region16: #{tpu_custom_call.1} parent=1 // pred_region
      %48 = dma.done [#allocation3], 1024
    $region17: #{tpu_custom_call.1} parent=1 // pred_fallthru
      _
    // Predicated region
    $region18: #{tpu_custom_call.1} parent=1 // pred_check
      _
    $region19: #{tpu_custom_call.1} parent=1 // pred_check_branch
      %50 = sbr.rel (0) target = $region21
    $region20: #{tpu_custom_call.1} parent=1 // pred_region
      %52 = dma.done [#allocation5], 128
    $region21: #{tpu_custom_call.1} parent=1 // pred_fallthru
      _
    // Predicated region
    $region22: #{tpu_custom_call.1} parent=1 // pred_check
      _
    $region23: #{tpu_custom_call.1} parent=1 // pred_check_branch
      %54 = sbr.rel (0) target = $region25
    $region24: #{tpu_custom_call.1} parent=1 // pred_region
      %56 = dma.done [#allocation5], 128
    $region25: #{tpu_custom_call.1} parent=1 // pred_fallthru
      _
    %v57 = vld [vmem:[#allocation2] sm:$0xff]
    %v58 = vld [vmem:[#allocation2 + $0x8] sm:$0xff]
    %v59 = vld [vmem:[#allocation2 + $0x10] sm:$0xff]
    %v60 = vld [vmem:[#allocation2 + $0x18] sm:$0xff]
    %v61 = vld [vmem:[#allocation2 + $0x20] sm:$0xff]
    %v62 = vld [vmem:[#allocation2 + $0x28] sm:$0xff]
    %v63 = vld [vmem:[#allocation2 + $0x30] sm:$0xff]
    %v64 = vld [vmem:[#allocation2 + $0x38] sm:$0xff]
    %v65 = vld [vmem:[#allocation4] sm:$0xff]
    %v66 = vld [vmem:[#allocation6] sm:$0xff]
    %v67 = vlaneseq
    %v68 = vand.u32 %v67, 127
    %vm69 = vcmp.eq.s32.totalorder %v68, 1
    %v70 = vsel %vm69, 0.0, -10000.0
    %v72 = vrot.slane %v70, 1
    %v73 = vrot.slane %v70, 2
    %v74 = vrot.slane %v70, 3
    %v75 = vrot.slane %v70, 4
    %v76 = vrot.slane %v70, 5
    %v77 = vrot.slane %v70, 6
    %v78 = vrot.slane %v70, 7
    %v79 = vperm.slane %v70, 0
    %v80 = vperm.slane %v72, 0
    %v81 = vperm.slane %v73, 0
    %v82 = vperm.slane %v74, 0
    %v83 = vperm.slane %v75, 0
    %v84 = vperm.slane %v76, 0
    %v85 = vperm.slane %v77, 0
    %v86 = vperm.slane %v78, 0
    %v95 = vadd.f32 %v79, %v66
    %v96 = vadd.f32 %v80, %v66
    %v97 = vadd.f32 %v81, %v66
    %v98 = vadd.f32 %v82, %v66
    %v99 = vadd.f32 %v83, %v66
    %v100 = vadd.f32 %v84, %v66
    %v101 = vadd.f32 %v85, %v66
    %v102 = vadd.f32 %v86, %v66
    %vm103 = vcmask 64512
    %v104 = vsel %vm103, %v95, -inf
    %105 = vmax.xlane.f32.xlu0 %v104
    %v106 = vpop.xlane.xlu0 %105
    %v107 = vsel %vm103, %v96, -inf
    %108 = vmax.xlane.f32.xlu0 %v107
    %v109 = vpop.xlane.xlu0 %108
    %v110 = vsel %vm103, %v97, -inf
    %111 = vmax.xlane.f32.xlu0 %v110
    %v112 = vpop.xlane.xlu0 %111
    %v113 = vsel %vm103, %v98, -inf
    %114 = vmax.xlane.f32.xlu0 %v113
    %v115 = vpop.xlane.xlu0 %114
    %v116 = vsel %vm103, %v99, -inf
    %117 = vmax.xlane.f32.xlu0 %v116
    %v118 = vpop.xlane.xlu0 %117
    %v119 = vsel %vm103, %v100, -inf
    %120 = vmax.xlane.f32.xlu0 %v119
    %v121 = vpop.xlane.xlu0 %120
    %v122 = vsel %vm103, %v101, -inf
    %123 = vmax.xlane.f32.xlu0 %v122
    %v124 = vpop.xlane.xlu0 %123
    %v125 = vsel %vm103, %v102, -inf
    %126 = vmax.xlane.f32.xlu0 %v125
    %v127 = vpop.xlane.xlu0 %126
    %v128 = vsub.f32 %v95, %v106
    %v129 = vsub.f32 %v96, %v109
    %v130 = vsub.f32 %v97, %v112
    %v131 = vsub.f32 %v98, %v115
    %v132 = vsub.f32 %v99, %v118
    %v133 = vsub.f32 %v100, %v121
    %v134 = vsub.f32 %v101, %v124
    %v135 = vsub.f32 %v102, %v127
    %v136 = vmul.f32 %v128, 1.442695
    %v137 = vpow.pop %v136
    %v138 = vmul.f32 %v129, 1.442695
    %v139 = vpow.pop %v138
    %v140 = vmul.f32 %v130, 1.442695
    %v141 = vpow.pop %v140
    %v142 = vmul.f32 %v131, 1.442695
    %v143 = vpow.pop %v142
    %v144 = vmul.f32 %v132, 1.442695
    %v145 = vpow.pop %v144
    %v146 = vmul.f32 %v133, 1.442695
    %v147 = vpow.pop %v146
    %v148 = vmul.f32 %v134, 1.442695
    %v149 = vpow.pop %v148
    %v150 = vmul.f32 %v135, 1.442695
    %v151 = vpow.pop %v150
    %v152 = vsel %vm103, %v137, 0.0
    %153 = vadd.xlane.f32.xlu0 %v152
    %v154 = vpop.xlane.xlu0 %153
    %v155 = vsel %vm103, %v139, 0.0
    %156 = vadd.xlane.f32.xlu0 %v155
    %v157 = vpop.xlane.xlu0 %156
    %v158 = vsel %vm103, %v141, 0.0
    %159 = vadd.xlane.f32.xlu0 %v158
    %v160 = vpop.xlane.xlu0 %159
    %v161 = vsel %vm103, %v143, 0.0
    %162 = vadd.xlane.f32.xlu0 %v161
    %v163 = vpop.xlane.xlu0 %162
    %v164 = vsel %vm103, %v145, 0.0
    %165 = vadd.xlane.f32.xlu0 %v164
    %v166 = vpop.xlane.xlu0 %165
    %v167 = vsel %vm103, %v147, 0.0
    %168 = vadd.xlane.f32.xlu0 %v167
    %v169 = vpop.xlane.xlu0 %168
    %v170 = vsel %vm103, %v149, 0.0
    %171 = vadd.xlane.f32.xlu0 %v170
    %v172 = vpop.xlane.xlu0 %171
    %v173 = vsel %vm103, %v151, 0.0
    %174 = vadd.xlane.f32.xlu0 %v173
    %v175 = vpop.xlane.xlu0 %174
    %v176 = vlog2.pop %v154
    %v177 = vmul.f32 %v176, 0.6931472
    %v178 = vlog2.pop %v157
    %v179 = vmul.f32 %v178, 0.6931472
    %v180 = vlog2.pop %v160
    %v181 = vmul.f32 %v180, 0.6931472
    %v182 = vlog2.pop %v163
    %v183 = vmul.f32 %v182, 0.6931472
    %v184 = vlog2.pop %v166
    %v185 = vmul.f32 %v184, 0.6931472
    %v186 = vlog2.pop %v169
    %v187 = vmul.f32 %v186, 0.6931472
    %v188 = vlog2.pop %v172
    %v189 = vmul.f32 %v188, 0.6931472
    %v190 = vlog2.pop %v175
    %v191 = vmul.f32 %v190, 0.6931472
    %v192 = vadd.f32 %v106, %v177
    %v193 = vadd.f32 %v109, %v179
    %v194 = vadd.f32 %v112, %v181
    %v195 = vadd.f32 %v115, %v183
    %v196 = vadd.f32 %v118, %v185
    %v197 = vadd.f32 %v121, %v187
    %v198 = vadd.f32 %v124, %v189
    %v199 = vadd.f32 %v127, %v191
    %v208 = vperm.slane %v57, 0
    %v209 = vlaneseq
    %v210 = vshrl.u32 %v209, 7
    %212 = vset.pattern.permute.xlu0 %v210
    %213 = vperm.xlu0 %212, %v208
    %v214 = vpop.permute.xlu0 %213
    %v215 = vperm.slane %v58, 0
    %v216 = vlaneseq
    %v217 = vshrl.u32 %v216, 7
    %219 = vset.pattern.permute.xlu0 %v217
    %220 = vperm.xlu0 %219, %v215
    %v221 = vpop.permute.xlu0 %220
    %v222 = vperm.slane %v59, 0
    %v223 = vlaneseq
    %v224 = vshrl.u32 %v223, 7
    %226 = vset.pattern.permute.xlu0 %v224
    %227 = vperm.xlu0 %226, %v222
    %v228 = vpop.permute.xlu0 %227
    %v229 = vperm.slane %v60, 0
    %v230 = vlaneseq
    %v231 = vshrl.u32 %v230, 7
    %233 = vset.pattern.permute.xlu0 %v231
    %234 = vperm.xlu0 %233, %v229
    %v235 = vpop.permute.xlu0 %234
    %v236 = vperm.slane %v61, 0
    %v237 = vlaneseq
    %v238 = vshrl.u32 %v237, 7
    %240 = vset.pattern.permute.xlu0 %v238
    %241 = vperm.xlu0 %240, %v236
    %v242 = vpop.permute.xlu0 %241
    %v243 = vperm.slane %v62, 0
    %v244 = vlaneseq
    %v245 = vshrl.u32 %v244, 7
    %247 = vset.pattern.permute.xlu0 %v245
    %248 = vperm.xlu0 %247, %v243
    %v249 = vpop.permute.xlu0 %248
    %v250 = vperm.slane %v63, 0
    %v251 = vlaneseq
    %v252 = vshrl.u32 %v251, 7
    %254 = vset.pattern.permute.xlu0 %v252
    %255 = vperm.xlu0 %254, %v250
    %v256 = vpop.permute.xlu0 %255
    %v257 = vperm.slane %v64, 0
    %v258 = vlaneseq
    %v259 = vshrl.u32 %v258, 7
    %261 = vset.pattern.permute.xlu0 %v259
    %262 = vperm.xlu0 %261, %v257
    %v263 = vpop.permute.xlu0 %262
    %v272 = vadd.f32 %v192, %v214
    %v273 = vadd.f32 %v193, %v221
    %v274 = vadd.f32 %v194, %v228
    %v275 = vadd.f32 %v195, %v235
    %v276 = vadd.f32 %v196, %v242
    %v277 = vadd.f32 %v197, %v249
    %v278 = vadd.f32 %v198, %v256
    %v279 = vadd.f32 %v199, %v263
    %vm280 = vcmp.ne.f32.partialorder %v65, 0.0
    %v281 = vsel %vm280, 1, 0
    %282 = vset.pattern.permute.xlu0 0
    %283 = vperm.xlu0 %282, %v281
    %v284 = vpop.permute.xlu0 %283
    %vm285 = vcmp.eq.s32.totalorder %v284, 1
    %294 = vset.pattern.permute.xlu0 0
    %295 = vperm.xlu0 %294, %v272
    %v296 = vpop.permute.xlu0 %295
    %297 = vset.pattern.permute.xlu0 0
    %298 = vperm.xlu0 %297, %v273
    %v299 = vpop.permute.xlu0 %298
    %300 = vset.pattern.permute.xlu0 0
    %301 = vperm.xlu0 %300, %v274
    %v302 = vpop.permute.xlu0 %301
    %303 = vset.pattern.permute.xlu0 0
    %304 = vperm.xlu0 %303, %v275
    %v305 = vpop.permute.xlu0 %304
    %306 = vset.pattern.permute.xlu0 0
    %307 = vperm.xlu0 %306, %v276
    %v308 = vpop.permute.xlu0 %307
    %309 = vset.pattern.permute.xlu0 0
    %310 = vperm.xlu0 %309, %v277
    %v311 = vpop.permute.xlu0 %310
    %312 = vset.pattern.permute.xlu0 0
    %313 = vperm.xlu0 %312, %v278
    %v314 = vpop.permute.xlu0 %313
    %315 = vset.pattern.permute.xlu0 0
    %316 = vperm.xlu0 %315, %v279
    %v317 = vpop.permute.xlu0 %316
    %v318 = vperm.slane %v296, %v68
    %v319 = vperm.slane %v299, %v68
    %v320 = vperm.slane %v302, %v68
    %v321 = vperm.slane %v305, %v68
    %v322 = vperm.slane %v308, %v68
    %v323 = vperm.slane %v311, %v68
    %v324 = vperm.slane %v314, %v68
    %v325 = vperm.slane %v317, %v68
    %vm326 = vcmask 1041409
    %v327 = vsel %vm326, %v319, %v318
    %vm328 = vcmask 1042434
    %v329 = vsel %vm328, %v320, %v327
    %vm330 = vcmask 1043459
    %v331 = vsel %vm330, %v321, %v329
    %vm332 = vcmask 1044484
    %v333 = vsel %vm332, %v322, %v331
    %vm334 = vcmask 1045509
    %v335 = vsel %vm334, %v323, %v333
    %vm336 = vcmask 1046534
    %v337 = vsel %vm336, %v324, %v335
    %vm338 = vcmask 1047559
    %v339 = vsel %vm338, %v325, %v337
    %v341 = vsel %vm285, %v339, %v70
    %v343 = vrot.slane %v341, 1
    %v344 = vrot.slane %v341, 2
    %v345 = vrot.slane %v341, 3
    %v346 = vrot.slane %v341, 4
    %v347 = vrot.slane %v341, 5
    %v348 = vrot.slane %v341, 6
    %v349 = vrot.slane %v341, 7
    %v350 = vperm.slane %v341, 0
    %v351 = vperm.slane %v343, 0
    %v352 = vperm.slane %v344, 0
    %v353 = vperm.slane %v345, 0
    %v354 = vperm.slane %v346, 0
    %v355 = vperm.slane %v347, 0
    %v356 = vperm.slane %v348, 0
    %v357 = vperm.slane %v349, 0
    %v366 = vadd.f32 %v350, %v66
    %v367 = vadd.f32 %v351, %v66
    %v368 = vadd.f32 %v352, %v66
    %v369 = vadd.f32 %v353, %v66
    %v370 = vadd.f32 %v354, %v66
    %v371 = vadd.f32 %v355, %v66
    %v372 = vadd.f32 %v356, %v66
    %v373 = vadd.f32 %v357, %v66
    %v374 = vsel %vm103, %v366, -inf
    %375 = vmax.xlane.f32.xlu0 %v374
    %v376 = vpop.xlane.xlu0 %375
    %v377 = vsel %vm103, %v367, -inf
    %378 = vmax.xlane.f32.xlu0 %v377
    %v379 = vpop.xlane.xlu0 %378
    %v380 = vsel %vm103, %v368, -inf
    %381 = vmax.xlane.f32.xlu0 %v380
    %v382 = vpop.xlane.xlu0 %381
    %v383 = vsel %vm103, %v369, -inf
    %384 = vmax.xlane.f32.xlu0 %v383
    %v385 = vpop.xlane.xlu0 %384
    %v386 = vsel %vm103, %v370, -inf
    %387 = vmax.xlane.f32.xlu0 %v386
    %v388 = vpop.xlane.xlu0 %387
    %v389 = vsel %vm103, %v371, -inf
    %390 = vmax.xlane.f32.xlu0 %v389
    %v391 = vpop.xlane.xlu0 %390
    %v392 = vsel %vm103, %v372, -inf
    %393 = vmax.xlane.f32.xlu0 %v392
    %v394 = vpop.xlane.xlu0 %393
    %v395 = vsel %vm103, %v373, -inf
    %396 = vmax.xlane.f32.xlu0 %v395
    %v397 = vpop.xlane.xlu0 %396
    %v398 = vsub.f32 %v366, %v376
    %v399 = vsub.f32 %v367, %v379
    %v400 = vsub.f32 %v368, %v382
    %v401 = vsub.f32 %v369, %v385
    %v402 = vsub.f32 %v370, %v388
    %v403 = vsub.f32 %v371, %v391
    %v404 = vsub.f32 %v372, %v394
    %v405 = vsub.f32 %v373, %v397
    %v406 = vmul.f32 %v398, 1.442695
    %v407 = vpow.pop %v406
    %v408 = vmul.f32 %v399, 1.442695
    %v409 = vpow.pop %v408
    %v410 = vmul.f32 %v400, 1.442695
    %v411 = vpow.pop %v410
    %v412 = vmul.f32 %v401, 1.442695
    %v413 = vpow.pop %v412
    %v414 = vmul.f32 %v402, 1.442695
    %v415 = vpow.pop %v414
    %v416 = vmul.f32 %v403, 1.442695
    %v417 = vpow.pop %v416
    %v418 = vmul.f32 %v404, 1.442695
    %v419 = vpow.pop %v418
    %v420 = vmul.f32 %v405, 1.442695
    %v421 = vpow.pop %v420
    %v422 = vsel %vm103, %v407, 0.0
    %423 = vadd.xlane.f32.xlu0 %v422
    %v424 = vpop.xlane.xlu0 %423
    %v425 = vsel %vm103, %v409, 0.0
    %426 = vadd.xlane.f32.xlu0 %v425
    %v427 = vpop.xlane.xlu0 %426
    %v428 = vsel %vm103, %v411, 0.0
    %429 = vadd.xlane.f32.xlu0 %v428
    %v430 = vpop.xlane.xlu0 %429
    %v431 = vsel %vm103, %v413, 0.0
    %432 = vadd.xlane.f32.xlu0 %v431
    %v433 = vpop.xlane.xlu0 %432
    %v434 = vsel %vm103, %v415, 0.0
    %435 = vadd.xlane.f32.xlu0 %v434
    %v436 = vpop.xlane.xlu0 %435
    %v437 = vsel %vm103, %v417, 0.0
    %438 = vadd.xlane.f32.xlu0 %v437
    %v439 = vpop.xlane.xlu0 %438
    %v440 = vsel %vm103, %v419, 0.0
    %441 = vadd.xlane.f32.xlu0 %v440
    %v442 = vpop.xlane.xlu0 %441
    %v443 = vsel %vm103, %v421, 0.0
    %444 = vadd.xlane.f32.xlu0 %v443
    %v445 = vpop.xlane.xlu0 %444
    %v446 = vlog2.pop %v424
    %v447 = vmul.f32 %v446, 0.6931472
    %v448 = vlog2.pop %v427
    %v449 = vmul.f32 %v448, 0.6931472
    %v450 = vlog2.pop %v430
    %v451 = vmul.f32 %v450, 0.6931472
    %v452 = vlog2.pop %v433
    %v453 = vmul.f32 %v452, 0.6931472
    %v454 = vlog2.pop %v436
    %v455 = vmul.f32 %v454, 0.6931472
    %v456 = vlog2.pop %v439
    %v457 = vmul.f32 %v456, 0.6931472
    %v458 = vlog2.pop %v442
    %v459 = vmul.f32 %v458, 0.6931472
    %v460 = vlog2.pop %v445
    %v461 = vmul.f32 %v460, 0.6931472
    %v462 = vadd.f32 %v376, %v447
    %v463 = vadd.f32 %v379, %v449
    %v464 = vadd.f32 %v382, %v451
    %v465 = vadd.f32 %v385, %v453
    %v466 = vadd.f32 %v388, %v455
    %v467 = vadd.f32 %v391, %v457
    %v468 = vadd.f32 %v394, %v459
    %v469 = vadd.f32 %v397, %v461
    %v470 = vperm.slane %v57, 1
    %v471 = vlaneseq
    %v472 = vshrl.u32 %v471, 7
    %474 = vset.pattern.permute.xlu0 %v472
    %475 = vperm.xlu0 %474, %v470
    %v476 = vpop.permute.xlu0 %475
    %v477 = vperm.slane %v58, 1
    %v478 = vlaneseq
    %v479 = vshrl.u32 %v478, 7
    %481 = vset.pattern.permute.xlu0 %v479
    %482 = vperm.xlu0 %481, %v477
    %v483 = vpop.permute.xlu0 %482
    %v484 = vperm.slane %v59, 1
    %v485 = vlaneseq
    %v486 = vshrl.u32 %v485, 7
    %488 = vset.pattern.permute.xlu0 %v486
    %489 = vperm.xlu0 %488, %v484
    %v490 = vpop.permute.xlu0 %489
    %v491 = vperm.slane %v60, 1
    %v492 = vlaneseq
    %v493 = vshrl.u32 %v492, 7
    %495 = vset.pattern.permute.xlu0 %v493
    %496 = vperm.xlu0 %495, %v491
    %v497 = vpop.permute.xlu0 %496
    %v498 = vperm.slane %v61, 1
    %v499 = vlaneseq
    %v500 = vshrl.u32 %v499, 7
    %502 = vset.pattern.permute.xlu0 %v500
    %503 = vperm.xlu0 %502, %v498
    %v504 = vpop.permute.xlu0 %503
    %v505 = vperm.slane %v62, 1
    %v506 = vlaneseq
    %v507 = vshrl.u32 %v506, 7
    %509 = vset.pattern.permute.xlu0 %v507
    %510 = vperm.xlu0 %509, %v505
    %v511 = vpop.permute.xlu0 %510
    %v512 = vperm.slane %v63, 1
    %v513 = vlaneseq
    %v514 = vshrl.u32 %v513, 7
    %516 = vset.pattern.permute.xlu0 %v514
    %517 = vperm.xlu0 %516, %v512
    %v518 = vpop.permute.xlu0 %517
    %v519 = vperm.slane %v64, 1
    %v520 = vlaneseq
    %v521 = vshrl.u32 %v520, 7
    %523 = vset.pattern.permute.xlu0 %v521
    %524 = vperm.xlu0 %523, %v519
    %v525 = vpop.permute.xlu0 %524
    %v534 = vadd.f32 %v462, %v476
    %v535 = vadd.f32 %v463, %v483
    %v536 = vadd.f32 %v464, %v490
    %v537 = vadd.f32 %v465, %v497
    %v538 = vadd.f32 %v466, %v504
    %v539 = vadd.f32 %v467, %v511
    %v540 = vadd.f32 %v468, %v518
    %v541 = vadd.f32 %v469, %v525
    %542 = vset.pattern.permute.xlu0 1
    %543 = vperm.xlu0 %542, %v281
    %v544 = vpop.permute.xlu0 %543
    %vm545 = vcmp.eq.s32.totalorder %v544, 1
    %554 = vset.pattern.permute.xlu0 0
    %555 = vperm.xlu0 %554, %v534
    %v556 = vpop.permute.xlu0 %555
    %557 = vset.pattern.permute.xlu0 0
    %558 = vperm.xlu0 %557, %v535
    %v559 = vpop.permute.xlu0 %558
    %560 = vset.pattern.permute.xlu0 0
    %561 = vperm.xlu0 %560, %v536
    %v562 = vpop.permute.xlu0 %561
    %563 = vset.pattern.permute.xlu0 0
    %564 = vperm.xlu0 %563, %v537
    %v565 = vpop.permute.xlu0 %564
    %566 = vset.pattern.permute.xlu0 0
    %567 = vperm.xlu0 %566, %v538
    %v568 = vpop.permute.xlu0 %567
    %569 = vset.pattern.permute.xlu0 0
    %570 = vperm.xlu0 %569, %v539
    %v571 = vpop.permute.xlu0 %570
    %572 = vset.pattern.permute.xlu0 0
    %573 = vperm.xlu0 %572, %v540
    %v574 = vpop.permute.xlu0 %573
    %575 = vset.pattern.permute.xlu0 0
    %576 = vperm.xlu0 %575, %v541
    %v577 = vpop.permute.xlu0 %576
    %v578 = vperm.slane %v556, %v68
    %v579 = vperm.slane %v559, %v68
    %v580 = vperm.slane %v562, %v68
    %v581 = vperm.slane %v565, %v68
    %v582 = vperm.slane %v568, %v68
    %v583 = vperm.slane %v571, %v68
    %v584 = vperm.slane %v574, %v68
    %v585 = vperm.slane %v577, %v68
    %v586 = vsel %vm326, %v579, %v578
    %v587 = vsel %vm328, %v580, %v586
    %v588 = vsel %vm330, %v581, %v587
    %v589 = vsel %vm332, %v582, %v588
    %v590 = vsel %vm334, %v583, %v589
    %v591 = vsel %vm336, %v584, %v590
    %v592 = vsel %vm338, %v585, %v591
    %v594 = vsel %vm545, %v592, %v341
    %v596 = vrot.slane %v594, 1
    %v597 = vrot.slane %v594, 2
    %v598 = vrot.slane %v594, 3
    %v599 = vrot.slane %v594, 4
    %v600 = vrot.slane %v594, 5
    %v601 = vrot.slane %v594, 6
    %v602 = vrot.slane %v594, 7
    %v603 = vperm.slane %v594, 0
    %v604 = vperm.slane %v596, 0
    %v605 = vperm.slane %v597, 0
    %v606 = vperm.slane %v598, 0
    %v607 = vperm.slane %v599, 0
    %v608 = vperm.slane %v600, 0
    %v609 = vperm.slane %v601, 0
    %v610 = vperm.slane %v602, 0
    %v619 = vadd.f32 %v603, %v66
    %v620 = vadd.f32 %v604, %v66
    %v621 = vadd.f32 %v605, %v66
    %v622 = vadd.f32 %v606, %v66
    %v623 = vadd.f32 %v607, %v66
    %v624 = vadd.f32 %v608, %v66
    %v625 = vadd.f32 %v609, %v66
    %v626 = vadd.f32 %v610, %v66
    %v627 = vsel %vm103, %v619, -inf
    %628 = vmax.xlane.f32.xlu0 %v627
    %v629 = vpop.xlane.xlu0 %628
    %v630 = vsel %vm103, %v620, -inf
    %631 = vmax.xlane.f32.xlu0 %v630
    %v632 = vpop.xlane.xlu0 %631
    %v633 = vsel %vm103, %v621, -inf
    %634 = vmax.xlane.f32.xlu0 %v633
    %v635 = vpop.xlane.xlu0 %634
    %v636 = vsel %vm103, %v622, -inf
    %637 = vmax.xlane.f32.xlu0 %v636
    %v638 = vpop.xlane.xlu0 %637
    %v639 = vsel %vm103, %v623, -inf
    %640 = vmax.xlane.f32.xlu0 %v639
    %v641 = vpop.xlane.xlu0 %640
    %v642 = vsel %vm103, %v624, -inf
    %643 = vmax.xlane.f32.xlu0 %v642
    %v644 = vpop.xlane.xlu0 %643
    %v645 = vsel %vm103, %v625, -inf
    %646 = vmax.xlane.f32.xlu0 %v645
    %v647 = vpop.xlane.xlu0 %646
    %v648 = vsel %vm103, %v626, -inf
    %649 = vmax.xlane.f32.xlu0 %v648
    %v650 = vpop.xlane.xlu0 %649
    %v651 = vsub.f32 %v619, %v629
    %v652 = vsub.f32 %v620, %v632
    %v653 = vsub.f32 %v621, %v635
    %v654 = vsub.f32 %v622, %v638
    %v655 = vsub.f32 %v623, %v641
    %v656 = vsub.f32 %v624, %v644
    %v657 = vsub.f32 %v625, %v647
    %v658 = vsub.f32 %v626, %v650
    %v659 = vmul.f32 %v651, 1.442695
    %v660 = vpow.pop %v659
    %v661 = vmul.f32 %v652, 1.442695
    %v662 = vpow.pop %v661
    %v663 = vmul.f32 %v653, 1.442695
    %v664 = vpow.pop %v663
    %v665 = vmul.f32 %v654, 1.442695
    %v666 = vpow.pop %v665
    %v667 = vmul.f32 %v655, 1.442695
    %v668 = vpow.pop %v667
    %v669 = vmul.f32 %v656, 1.442695
    %v670 = vpow.pop %v669
    %v671 = vmul.f32 %v657, 1.442695
    %v672 = vpow.pop %v671
    %v673 = vmul.f32 %v658, 1.442695
    %v674 = vpow.pop %v673
    %v675 = vsel %vm103, %v660, 0.0
    %676 = vadd.xlane.f32.xlu0 %v675
    %v677 = vpop.xlane.xlu0 %676
    %v678 = vsel %vm103, %v662, 0.0
    %679 = vadd.xlane.f32.xlu0 %v678
    %v680 = vpop.xlane.xlu0 %679
    %v681 = vsel %vm103, %v664, 0.0
    %682 = vadd.xlane.f32.xlu0 %v681
    %v683 = vpop.xlane.xlu0 %682
    %v684 = vsel %vm103, %v666, 0.0
    %685 = vadd.xlane.f32.xlu0 %v684
    %v686 = vpop.xlane.xlu0 %685
    %v687 = vsel %vm103, %v668, 0.0
    %688 = vadd.xlane.f32.xlu0 %v687
    %v689 = vpop.xlane.xlu0 %688
    %v690 = vsel %vm103, %v670, 0.0
    %691 = vadd.xlane.f32.xlu0 %v690
    %v692 = vpop.xlane.xlu0 %691
    %v693 = vsel %vm103, %v672, 0.0
    %694 = vadd.xlane.f32.xlu0 %v693
    %v695 = vpop.xlane.xlu0 %694
    %v696 = vsel %vm103, %v674, 0.0
    %697 = vadd.xlane.f32.xlu0 %v696
    %v698 = vpop.xlane.xlu0 %697
    %v699 = vlog2.pop %v677
    %v700 = vmul.f32 %v699, 0.6931472
    %v701 = vlog2.pop %v680
    %v702 = vmul.f32 %v701, 0.6931472
    %v703 = vlog2.pop %v683
    %v704 = vmul.f32 %v703, 0.6931472
    %v705 = vlog2.pop %v686
    %v706 = vmul.f32 %v705, 0.6931472
    %v707 = vlog2.pop %v689
    %v708 = vmul.f32 %v707, 0.6931472
    %v709 = vlog2.pop %v692
    %v710 = vmul.f32 %v709, 0.6931472
    %v711 = vlog2.pop %v695
    %v712 = vmul.f32 %v711, 0.6931472
    %v713 = vlog2.pop %v698
    %v714 = vmul.f32 %v713, 0.6931472
    %v715 = vadd.f32 %v629, %v700
    %v716 = vadd.f32 %v632, %v702
    %v717 = vadd.f32 %v635, %v704
    %v718 = vadd.f32 %v638, %v706
    %v719 = vadd.f32 %v641, %v708
    %v720 = vadd.f32 %v644, %v710
    %v721 = vadd.f32 %v647, %v712
    %v722 = vadd.f32 %v650, %v714
    %v723 = vperm.slane %v57, 2
    %v724 = vlaneseq
    %v725 = vshrl.u32 %v724, 7
    %727 = vset.pattern.permute.xlu0 %v725
    %728 = vperm.xlu0 %727, %v723
    %v729 = vpop.permute.xlu0 %728
    %v730 = vperm.slane %v58, 2
    %v731 = vlaneseq
    %v732 = vshrl.u32 %v731, 7
    %734 = vset.pattern.permute.xlu0 %v732
    %735 = vperm.xlu0 %734, %v730
    %v736 = vpop.permute.xlu0 %735
    %v737 = vperm.slane %v59, 2
    %v738 = vlaneseq
    %v739 = vshrl.u32 %v738, 7
    %741 = vset.pattern.permute.xlu0 %v739
    %742 = vperm.xlu0 %741, %v737
    %v743 = vpop.permute.xlu0 %742
    %v744 = vperm.slane %v60, 2
    %v745 = vlaneseq
    %v746 = vshrl.u32 %v745, 7
    %748 = vset.pattern.permute.xlu0 %v746
    %749 = vperm.xlu0 %748, %v744
    %v750 = vpop.permute.xlu0 %749
    %v751 = vperm.slane %v61, 2
    %v752 = vlaneseq
    %v753 = vshrl.u32 %v752, 7
    %755 = vset.pattern.permute.xlu0 %v753
    %756 = vperm.xlu0 %755, %v751
    %v757 = vpop.permute.xlu0 %756
    %v758 = vperm.slane %v62, 2
    %v759 = vlaneseq
    %v760 = vshrl.u32 %v759, 7
    %762 = vset.pattern.permute.xlu0 %v760
    %763 = vperm.xlu0 %762, %v758
    %v764 = vpop.permute.xlu0 %763
    %v765 = vperm.slane %v63, 2
    %v766 = vlaneseq
    %v767 = vshrl.u32 %v766, 7
    %769 = vset.pattern.permute.xlu0 %v767
    %770 = vperm.xlu0 %769, %v765
    %v771 = vpop.permute.xlu0 %770
    %v772 = vperm.slane %v64, 2
    %v773 = vlaneseq
    %v774 = vshrl.u32 %v773, 7
    %776 = vset.pattern.permute.xlu0 %v774
    %777 = vperm.xlu0 %776, %v772
    %v778 = vpop.permute.xlu0 %777
    %v787 = vadd.f32 %v715, %v729
    %v788 = vadd.f32 %v716, %v736
    %v789 = vadd.f32 %v717, %v743
    %v790 = vadd.f32 %v718, %v750
    %v791 = vadd.f32 %v719, %v757
    %v792 = vadd.f32 %v720, %v764
    %v793 = vadd.f32 %v721, %v771
    %v794 = vadd.f32 %v722, %v778
    %795 = vset.pattern.permute.xlu0 2
    %796 = vperm.xlu0 %795, %v281
    %v797 = vpop.permute.xlu0 %796
    %vm798 = vcmp.eq.s32.totalorder %v797, 1
    %807 = vset.pattern.permute.xlu0 0
    %808 = vperm.xlu0 %807, %v787
    %v809 = vpop.permute.xlu0 %808
    %810 = vset.pattern.permute.xlu0 0
    %811 = vperm.xlu0 %810, %v788
    %v812 = vpop.permute.xlu0 %811
    %813 = vset.pattern.permute.xlu0 0
    %814 = vperm.xlu0 %813, %v789
    %v815 = vpop.permute.xlu0 %814
    %816 = vset.pattern.permute.xlu0 0
    %817 = vperm.xlu0 %816, %v790
    %v818 = vpop.permute.xlu0 %817
    %819 = vset.pattern.permute.xlu0 0
    %820 = vperm.xlu0 %819, %v791
    %v821 = vpop.permute.xlu0 %820
    %822 = vset.pattern.permute.xlu0 0
    %823 = vperm.xlu0 %822, %v792
    %v824 = vpop.permute.xlu0 %823
    %825 = vset.pattern.permute.xlu0 0
    %826 = vperm.xlu0 %825, %v793
    %v827 = vpop.permute.xlu0 %826
    %828 = vset.pattern.permute.xlu0 0
    %829 = vperm.xlu0 %828, %v794
    %v830 = vpop.permute.xlu0 %829
    %v831 = vperm.slane %v809, %v68
    %v832 = vperm.slane %v812, %v68
    %v833 = vperm.slane %v815, %v68
    %v834 = vperm.slane %v818, %v68
    %v835 = vperm.slane %v821, %v68
    %v836 = vperm.slane %v824, %v68
    %v837 = vperm.slane %v827, %v68
    %v838 = vperm.slane %v830, %v68
    %v839 = vsel %vm326, %v832, %v831
    %v840 = vsel %vm328, %v833, %v839
    %v841 = vsel %vm330, %v834, %v840
    %v842 = vsel %vm332, %v835, %v841
    %v843 = vsel %vm334, %v836, %v842
    %v844 = vsel %vm336, %v837, %v843
    %v845 = vsel %vm338, %v838, %v844
    %v847 = vsel %vm798, %v845, %v594
    %v849 = vrot.slane %v847, 1
    %v850 = vrot.slane %v847, 2
    %v851 = vrot.slane %v847, 3
    %v852 = vrot.slane %v847, 4
    %v853 = vrot.slane %v847, 5
    %v854 = vrot.slane %v847, 6
    %v855 = vrot.slane %v847, 7
    %v856 = vperm.slane %v847, 0
    %v857 = vperm.slane %v849, 0
    %v858 = vperm.slane %v850, 0
    %v859 = vperm.slane %v851, 0
    %v860 = vperm.slane %v852, 0
    %v861 = vperm.slane %v853, 0
    %v862 = vperm.slane %v854, 0
    %v863 = vperm.slane %v855, 0
    %v872 = vadd.f32 %v856, %v66
    %v873 = vadd.f32 %v857, %v66
    %v874 = vadd.f32 %v858, %v66
    %v875 = vadd.f32 %v859, %v66
    %v876 = vadd.f32 %v860, %v66
    %v877 = vadd.f32 %v861, %v66
    %v878 = vadd.f32 %v862, %v66
    %v879 = vadd.f32 %v863, %v66
    %v880 = vsel %vm103, %v872, -inf
    %881 = vmax.xlane.f32.xlu0 %v880
    %v882 = vpop.xlane.xlu0 %881
    %v883 = vsel %vm103, %v873, -inf
    %884 = vmax.xlane.f32.xlu0 %v883
    %v885 = vpop.xlane.xlu0 %884
    %v886 = vsel %vm103, %v874, -inf
    %887 = vmax.xlane.f32.xlu0 %v886
    %v888 = vpop.xlane.xlu0 %887
    %v889 = vsel %vm103, %v875, -inf
    %890 = vmax.xlane.f32.xlu0 %v889
    %v891 = vpop.xlane.xlu0 %890
    %v892 = vsel %vm103, %v876, -inf
    %893 = vmax.xlane.f32.xlu0 %v892
    %v894 = vpop.xlane.xlu0 %893
    %v895 = vsel %vm103, %v877, -inf
    %896 = vmax.xlane.f32.xlu0 %v895
    %v897 = vpop.xlane.xlu0 %896
    %v898 = vsel %vm103, %v878, -inf
    %899 = vmax.xlane.f32.xlu0 %v898
    %v900 = vpop.xlane.xlu0 %899
    %v901 = vsel %vm103, %v879, -inf
    %902 = vmax.xlane.f32.xlu0 %v901
    %v903 = vpop.xlane.xlu0 %902
    %v904 = vsub.f32 %v872, %v882
    %v905 = vsub.f32 %v873, %v885
    %v906 = vsub.f32 %v874, %v888
    %v907 = vsub.f32 %v875, %v891
    %v908 = vsub.f32 %v876, %v894
    %v909 = vsub.f32 %v877, %v897
    %v910 = vsub.f32 %v878, %v900
    %v911 = vsub.f32 %v879, %v903
    %v912 = vmul.f32 %v904, 1.442695
    %v913 = vpow.pop %v912
    %v914 = vmul.f32 %v905, 1.442695
    %v915 = vpow.pop %v914
    %v916 = vmul.f32 %v906, 1.442695
    %v917 = vpow.pop %v916
    %v918 = vmul.f32 %v907, 1.442695
    %v919 = vpow.pop %v918
    %v920 = vmul.f32 %v908, 1.442695
    %v921 = vpow.pop %v920
    %v922 = vmul.f32 %v909, 1.442695
    %v923 = vpow.pop %v922
    %v924 = vmul.f32 %v910, 1.442695
    %v925 = vpow.pop %v924
    %v926 = vmul.f32 %v911, 1.442695
    %v927 = vpow.pop %v926
    %v928 = vsel %vm103, %v913, 0.0
    %929 = vadd.xlane.f32.xlu0 %v928
    %v930 = vpop.xlane.xlu0 %929
    %v931 = vsel %vm103, %v915, 0.0
    %932 = vadd.xlane.f32.xlu0 %v931
    %v933 = vpop.xlane.xlu0 %932
    %v934 = vsel %vm103, %v917, 0.0
    %935 = vadd.xlane.f32.xlu0 %v934
    %v936 = vpop.xlane.xlu0 %935
    %v937 = vsel %vm103, %v919, 0.0
    %938 = vadd.xlane.f32.xlu0 %v937
    %v939 = vpop.xlane.xlu0 %938
    %v940 = vsel %vm103, %v921, 0.0
    %941 = vadd.xlane.f32.xlu0 %v940
    %v942 = vpop.xlane.xlu0 %941
    %v943 = vsel %vm103, %v923, 0.0
    %944 = vadd.xlane.f32.xlu0 %v943
    %v945 = vpop.xlane.xlu0 %944
    %v946 = vsel %vm103, %v925, 0.0
    %947 = vadd.xlane.f32.xlu0 %v946
    %v948 = vpop.xlane.xlu0 %947
    %v949 = vsel %vm103, %v927, 0.0
    %950 = vadd.xlane.f32.xlu0 %v949
    %v951 = vpop.xlane.xlu0 %950
    %v952 = vlog2.pop %v930
    %v953 = vmul.f32 %v952, 0.6931472
    %v954 = vlog2.pop %v933
    %v955 = vmul.f32 %v954, 0.6931472
    %v956 = vlog2.pop %v936
    %v957 = vmul.f32 %v956, 0.6931472
    %v958 = vlog2.pop %v939
    %v959 = vmul.f32 %v958, 0.6931472
    %v960 = vlog2.pop %v942
    %v961 = vmul.f32 %v960, 0.6931472
    %v962 = vlog2.pop %v945
    %v963 = vmul.f32 %v962, 0.6931472
    %v964 = vlog2.pop %v948
    %v965 = vmul.f32 %v964, 0.6931472
    %v966 = vlog2.pop %v951
    %v967 = vmul.f32 %v966, 0.6931472
    %v968 = vadd.f32 %v882, %v953
    %v969 = vadd.f32 %v885, %v955
    %v970 = vadd.f32 %v888, %v957
    %v971 = vadd.f32 %v891, %v959
    %v972 = vadd.f32 %v894, %v961
    %v973 = vadd.f32 %v897, %v963
    %v974 = vadd.f32 %v900, %v965
    %v975 = vadd.f32 %v903, %v967
    %v976 = vperm.slane %v57, 3
    %v977 = vlaneseq
    %v978 = vshrl.u32 %v977, 7
    %980 = vset.pattern.permute.xlu0 %v978
    %981 = vperm.xlu0 %980, %v976
    %v982 = vpop.permute.xlu0 %981
    %v983 = vperm.slane %v58, 3
    %v984 = vlaneseq
    %v985 = vshrl.u32 %v984, 7
    %987 = vset.pattern.permute.xlu0 %v985
    %988 = vperm.xlu0 %987, %v983
    %v989 = vpop.permute.xlu0 %988
    %v990 = vperm.slane %v59, 3
    %v991 = vlaneseq
    %v992 = vshrl.u32 %v991, 7
    %994 = vset.pattern.permute.xlu0 %v992
    %995 = vperm.xlu0 %994, %v990
    %v996 = vpop.permute.xlu0 %995
    %v997 = vperm.slane %v60, 3
    %v998 = vlaneseq
    %v999 = vshrl.u32 %v998, 7
    %1001 = vset.pattern.permute.xlu0 %v999
    %1002 = vperm.xlu0 %1001, %v997
    %v1003 = vpop.permute.xlu0 %1002
    %v1004 = vperm.slane %v61, 3
    %v1005 = vlaneseq
    %v1006 = vshrl.u32 %v1005, 7
    %1008 = vset.pattern.permute.xlu0 %v1006
    %1009 = vperm.xlu0 %1008, %v1004
    %v1010 = vpop.permute.xlu0 %1009
    %v1011 = vperm.slane %v62, 3
    %v1012 = vlaneseq
    %v1013 = vshrl.u32 %v1012, 7
    %1015 = vset.pattern.permute.xlu0 %v1013
    %1016 = vperm.xlu0 %1015, %v1011
    %v1017 = vpop.permute.xlu0 %1016
    %v1018 = vperm.slane %v63, 3
    %v1019 = vlaneseq
    %v1020 = vshrl.u32 %v1019, 7
    %1022 = vset.pattern.permute.xlu0 %v1020
    %1023 = vperm.xlu0 %1022, %v1018
    %v1024 = vpop.permute.xlu0 %1023
    %v1025 = vperm.slane %v64, 3
    %v1026 = vlaneseq
    %v1027 = vshrl.u32 %v1026, 7
    %1029 = vset.pattern.permute.xlu0 %v1027
    %1030 = vperm.xlu0 %1029, %v1025
    %v1031 = vpop.permute.xlu0 %1030
    %v1040 = vadd.f32 %v968, %v982
    %v1041 = vadd.f32 %v969, %v989
    %v1042 = vadd.f32 %v970, %v996
    %v1043 = vadd.f32 %v971, %v1003
    %v1044 = vadd.f32 %v972, %v1010
    %v1045 = vadd.f32 %v973, %v1017
    %v1046 = vadd.f32 %v974, %v1024
    %v1047 = vadd.f32 %v975, %v1031
    %1048 = vset.pattern.permute.xlu0 3
    %1049 = vperm.xlu0 %1048, %v281
    %v1050 = vpop.permute.xlu0 %1049
    %vm1051 = vcmp.eq.s32.totalorder %v1050, 1
    %1060 = vset.pattern.permute.xlu0 0
    %1061 = vperm.xlu0 %1060, %v1040
    %v1062 = vpop.permute.xlu0 %1061
    %1063 = vset.pattern.permute.xlu0 0
    %1064 = vperm.xlu0 %1063, %v1041
    %v1065 = vpop.permute.xlu0 %1064
    %1066 = vset.pattern.permute.xlu0 0
    %1067 = vperm.xlu0 %1066, %v1042
    %v1068 = vpop.permute.xlu0 %1067
    %1069 = vset.pattern.permute.xlu0 0
    %1070 = vperm.xlu0 %1069, %v1043
    %v1071 = vpop.permute.xlu0 %1070
    %1072 = vset.pattern.permute.xlu0 0
    %1073 = vperm.xlu0 %1072, %v1044
    %v1074 = vpop.permute.xlu0 %1073
    %1075 = vset.pattern.permute.xlu0 0
    %1076 = vperm.xlu0 %1075, %v1045
    %v1077 = vpop.permute.xlu0 %1076
    %1078 = vset.pattern.permute.xlu0 0
    %1079 = vperm.xlu0 %1078, %v1046
    %v1080 = vpop.permute.xlu0 %1079
    %1081 = vset.pattern.permute.xlu0 0
    %1082 = vperm.xlu0 %1081, %v1047
    %v1083 = vpop.permute.xlu0 %1082
    %v1084 = vperm.slane %v1062, %v68
    %v1085 = vperm.slane %v1065, %v68
    %v1086 = vperm.slane %v1068, %v68
    %v1087 = vperm.slane %v1071, %v68
    %v1088 = vperm.slane %v1074, %v68
    %v1089 = vperm.slane %v1077, %v68
    %v1090 = vperm.slane %v1080, %v68
    %v1091 = vperm.slane %v1083, %v68
    %v1092 = vsel %vm326, %v1085, %v1084
    %v1093 = vsel %vm328, %v1086, %v1092
    %v1094 = vsel %vm330, %v1087, %v1093
    %v1095 = vsel %vm332, %v1088, %v1094
    %v1096 = vsel %vm334, %v1089, %v1095
    %v1097 = vsel %vm336, %v1090, %v1096
    %v1098 = vsel %vm338, %v1091, %v1097
    %v1100 = vsel %vm1051, %v1098, %v847
    %v1102 = vrot.slane %v1100, 1
    %v1103 = vrot.slane %v1100, 2
    %v1104 = vrot.slane %v1100, 3
    %v1105 = vrot.slane %v1100, 4
    %v1106 = vrot.slane %v1100, 5
    %v1107 = vrot.slane %v1100, 6
    %v1108 = vrot.slane %v1100, 7
    %v1109 = vperm.slane %v1100, 0
    %v1110 = vperm.slane %v1102, 0
    %v1111 = vperm.slane %v1103, 0
    %v1112 = vperm.slane %v1104, 0
    %v1113 = vperm.slane %v1105, 0
    %v1114 = vperm.slane %v1106, 0
    %v1115 = vperm.slane %v1107, 0
    %v1116 = vperm.slane %v1108, 0
    %v1125 = vadd.f32 %v1109, %v66
    %v1126 = vadd.f32 %v1110, %v66
    %v1127 = vadd.f32 %v1111, %v66
    %v1128 = vadd.f32 %v1112, %v66
    %v1129 = vadd.f32 %v1113, %v66
    %v1130 = vadd.f32 %v1114, %v66
    %v1131 = vadd.f32 %v1115, %v66
    %v1132 = vadd.f32 %v1116, %v66
    %v1133 = vsel %vm103, %v1125, -inf
    %1134 = vmax.xlane.f32.xlu0 %v1133
    %v1135 = vpop.xlane.xlu0 %1134
    %v1136 = vsel %vm103, %v1126, -inf
    %1137 = vmax.xlane.f32.xlu0 %v1136
    %v1138 = vpop.xlane.xlu0 %1137
    %v1139 = vsel %vm103, %v1127, -inf
    %1140 = vmax.xlane.f32.xlu0 %v1139
    %v1141 = vpop.xlane.xlu0 %1140
    %v1142 = vsel %vm103, %v1128, -inf
    %1143 = vmax.xlane.f32.xlu0 %v1142
    %v1144 = vpop.xlane.xlu0 %1143
    %v1145 = vsel %vm103, %v1129, -inf
    %1146 = vmax.xlane.f32.xlu0 %v1145
    %v1147 = vpop.xlane.xlu0 %1146
    %v1148 = vsel %vm103, %v1130, -inf
    %1149 = vmax.xlane.f32.xlu0 %v1148
    %v1150 = vpop.xlane.xlu0 %1149
    %v1151 = vsel %vm103, %v1131, -inf
    %1152 = vmax.xlane.f32.xlu0 %v1151
    %v1153 = vpop.xlane.xlu0 %1152
    %v1154 = vsel %vm103, %v1132, -inf
    %1155 = vmax.xlane.f32.xlu0 %v1154
    %v1156 = vpop.xlane.xlu0 %1155
    %v1157 = vsub.f32 %v1125, %v1135
    %v1158 = vsub.f32 %v1126, %v1138
    %v1159 = vsub.f32 %v1127, %v1141
    %v1160 = vsub.f32 %v1128, %v1144
    %v1161 = vsub.f32 %v1129, %v1147
    %v1162 = vsub.f32 %v1130, %v1150
    %v1163 = vsub.f32 %v1131, %v1153
    %v1164 = vsub.f32 %v1132, %v1156
    %v1165 = vmul.f32 %v1157, 1.442695
    %v1166 = vpow.pop %v1165
    %v1167 = vmul.f32 %v1158, 1.442695
    %v1168 = vpow.pop %v1167
    %v1169 = vmul.f32 %v1159, 1.442695
    %v1170 = vpow.pop %v1169
    %v1171 = vmul.f32 %v1160, 1.442695
    %v1172 = vpow.pop %v1171
    %v1173 = vmul.f32 %v1161, 1.442695
    %v1174 = vpow.pop %v1173
    %v1175 = vmul.f32 %v1162, 1.442695
    %v1176 = vpow.pop %v1175
    %v1177 = vmul.f32 %v1163, 1.442695
    %v1178 = vpow.pop %v1177
    %v1179 = vmul.f32 %v1164, 1.442695
    %v1180 = vpow.pop %v1179
    %v1181 = vsel %vm103, %v1166, 0.0
    %1182 = vadd.xlane.f32.xlu0 %v1181
    %v1183 = vpop.xlane.xlu0 %1182
    %v1184 = vsel %vm103, %v1168, 0.0
    %1185 = vadd.xlane.f32.xlu0 %v1184
    %v1186 = vpop.xlane.xlu0 %1185
    %v1187 = vsel %vm103, %v1170, 0.0
    %1188 = vadd.xlane.f32.xlu0 %v1187
    %v1189 = vpop.xlane.xlu0 %1188
    %v1190 = vsel %vm103, %v1172, 0.0
    %1191 = vadd.xlane.f32.xlu0 %v1190
    %v1192 = vpop.xlane.xlu0 %1191
    %v1193 = vsel %vm103, %v1174, 0.0
    %1194 = vadd.xlane.f32.xlu0 %v1193
    %v1195 = vpop.xlane.xlu0 %1194
    %v1196 = vsel %vm103, %v1176, 0.0
    %1197 = vadd.xlane.f32.xlu0 %v1196
    %v1198 = vpop.xlane.xlu0 %1197
    %v1199 = vsel %vm103, %v1178, 0.0
    %1200 = vadd.xlane.f32.xlu0 %v1199
    %v1201 = vpop.xlane.xlu0 %1200
    %v1202 = vsel %vm103, %v1180, 0.0
    %1203 = vadd.xlane.f32.xlu0 %v1202
    %v1204 = vpop.xlane.xlu0 %1203
    %v1205 = vlog2.pop %v1183
    %v1206 = vmul.f32 %v1205, 0.6931472
    %v1207 = vlog2.pop %v1186
    %v1208 = vmul.f32 %v1207, 0.6931472
    %v1209 = vlog2.pop %v1189
    %v1210 = vmul.f32 %v1209, 0.6931472
    %v1211 = vlog2.pop %v1192
    %v1212 = vmul.f32 %v1211, 0.6931472
    %v1213 = vlog2.pop %v1195
    %v1214 = vmul.f32 %v1213, 0.6931472
    %v1215 = vlog2.pop %v1198
    %v1216 = vmul.f32 %v1215, 0.6931472
    %v1217 = vlog2.pop %v1201
    %v1218 = vmul.f32 %v1217, 0.6931472
    %v1219 = vlog2.pop %v1204
    %v1220 = vmul.f32 %v1219, 0.6931472
    %v1221 = vadd.f32 %v1135, %v1206
    %v1222 = vadd.f32 %v1138, %v1208
    %v1223 = vadd.f32 %v1141, %v1210
    %v1224 = vadd.f32 %v1144, %v1212
    %v1225 = vadd.f32 %v1147, %v1214
    %v1226 = vadd.f32 %v1150, %v1216
    %v1227 = vadd.f32 %v1153, %v1218
    %v1228 = vadd.f32 %v1156, %v1220
    %v1229 = vperm.slane %v57, 4
    %v1230 = vlaneseq
    %v1231 = vshrl.u32 %v1230, 7
    %1233 = vset.pattern.permute.xlu0 %v1231
    %1234 = vperm.xlu0 %1233, %v1229
    %v1235 = vpop.permute.xlu0 %1234
    %v1236 = vperm.slane %v58, 4
    %v1237 = vlaneseq
    %v1238 = vshrl.u32 %v1237, 7
    %1240 = vset.pattern.permute.xlu0 %v1238
    %1241 = vperm.xlu0 %1240, %v1236
    %v1242 = vpop.permute.xlu0 %1241
    %v1243 = vperm.slane %v59, 4
    %v1244 = vlaneseq
    %v1245 = vshrl.u32 %v1244, 7
    %1247 = vset.pattern.permute.xlu0 %v1245
    %1248 = vperm.xlu0 %1247, %v1243
    %v1249 = vpop.permute.xlu0 %1248
    %v1250 = vperm.slane %v60, 4
    %v1251 = vlaneseq
    %v1252 = vshrl.u32 %v1251, 7
    %1254 = vset.pattern.permute.xlu0 %v1252
    %1255 = vperm.xlu0 %1254, %v1250
    %v1256 = vpop.permute.xlu0 %1255
    %v1257 = vperm.slane %v61, 4
    %v1258 = vlaneseq
    %v1259 = vshrl.u32 %v1258, 7
    %1261 = vset.pattern.permute.xlu0 %v1259
    %1262 = vperm.xlu0 %1261, %v1257
    %v1263 = vpop.permute.xlu0 %1262
    %v1264 = vperm.slane %v62, 4
    %v1265 = vlaneseq
    %v1266 = vshrl.u32 %v1265, 7
    %1268 = vset.pattern.permute.xlu0 %v1266
    %1269 = vperm.xlu0 %1268, %v1264
    %v1270 = vpop.permute.xlu0 %1269
    %v1271 = vperm.slane %v63, 4
    %v1272 = vlaneseq
    %v1273 = vshrl.u32 %v1272, 7
    %1275 = vset.pattern.permute.xlu0 %v1273
    %1276 = vperm.xlu0 %1275, %v1271
    %v1277 = vpop.permute.xlu0 %1276
    %v1278 = vperm.slane %v64, 4
    %v1279 = vlaneseq
    %v1280 = vshrl.u32 %v1279, 7
    %1282 = vset.pattern.permute.xlu0 %v1280
    %1283 = vperm.xlu0 %1282, %v1278
    %v1284 = vpop.permute.xlu0 %1283
    %v1293 = vadd.f32 %v1221, %v1235
    %v1294 = vadd.f32 %v1222, %v1242
    %v1295 = vadd.f32 %v1223, %v1249
    %v1296 = vadd.f32 %v1224, %v1256
    %v1297 = vadd.f32 %v1225, %v1263
    %v1298 = vadd.f32 %v1226, %v1270
    %v1299 = vadd.f32 %v1227, %v1277
    %v1300 = vadd.f32 %v1228, %v1284
    %1301 = vset.pattern.permute.xlu0 4
    %1302 = vperm.xlu0 %1301, %v281
    %v1303 = vpop.permute.xlu0 %1302
    %vm1304 = vcmp.eq.s32.totalorder %v1303, 1
    %1313 = vset.pattern.permute.xlu0 0
    %1314 = vperm.xlu0 %1313, %v1293
    %v1315 = vpop.permute.xlu0 %1314
    %1316 = vset.pattern.permute.xlu0 0
    %1317 = vperm.xlu0 %1316, %v1294
    %v1318 = vpop.permute.xlu0 %1317
    %1319 = vset.pattern.permute.xlu0 0
    %1320 = vperm.xlu0 %1319, %v1295
    %v1321 = vpop.permute.xlu0 %1320
    %1322 = vset.pattern.permute.xlu0 0
    %1323 = vperm.xlu0 %1322, %v1296
    %v1324 = vpop.permute.xlu0 %1323
    %1325 = vset.pattern.permute.xlu0 0
    %1326 = vperm.xlu0 %1325, %v1297
    %v1327 = vpop.permute.xlu0 %1326
    %1328 = vset.pattern.permute.xlu0 0
    %1329 = vperm.xlu0 %1328, %v1298
    %v1330 = vpop.permute.xlu0 %1329
    %1331 = vset.pattern.permute.xlu0 0
    %1332 = vperm.xlu0 %1331, %v1299
    %v1333 = vpop.permute.xlu0 %1332
    %1334 = vset.pattern.permute.xlu0 0
    %1335 = vperm.xlu0 %1334, %v1300
    %v1336 = vpop.permute.xlu0 %1335
    %v1337 = vperm.slane %v1315, %v68
    %v1338 = vperm.slane %v1318, %v68
    %v1339 = vperm.slane %v1321, %v68
    %v1340 = vperm.slane %v1324, %v68
    %v1341 = vperm.slane %v1327, %v68
    %v1342 = vperm.slane %v1330, %v68
    %v1343 = vperm.slane %v1333, %v68
    %v1344 = vperm.slane %v1336, %v68
    %v1345 = vsel %vm326, %v1338, %v1337
    %v1346 = vsel %vm328, %v1339, %v1345
    %v1347 = vsel %vm330, %v1340, %v1346
    %v1348 = vsel %vm332, %v1341, %v1347
    %v1349 = vsel %vm334, %v1342, %v1348
    %v1350 = vsel %vm336, %v1343, %v1349
    %v1351 = vsel %vm338, %v1344, %v1350
    %v1353 = vsel %vm1304, %v1351, %v1100
    %v1355 = vrot.slane %v1353, 1
    %v1356 = vrot.slane %v1353, 2
    %v1357 = vrot.slane %v1353, 3
    %v1358 = vrot.slane %v1353, 4
    %v1359 = vrot.slane %v1353, 5
    %v1360 = vrot.slane %v1353, 6
    %v1361 = vrot.slane %v1353, 7
    %v1362 = vperm.slane %v1353, 0
    %v1363 = vperm.slane %v1355, 0
    %v1364 = vperm.slane %v1356, 0
    %v1365 = vperm.slane %v1357, 0
    %v1366 = vperm.slane %v1358, 0
    %v1367 = vperm.slane %v1359, 0
    %v1368 = vperm.slane %v1360, 0
    %v1369 = vperm.slane %v1361, 0
    %v1378 = vadd.f32 %v1362, %v66
    %v1379 = vadd.f32 %v1363, %v66
    %v1380 = vadd.f32 %v1364, %v66
    %v1381 = vadd.f32 %v1365, %v66
    %v1382 = vadd.f32 %v1366, %v66
    %v1383 = vadd.f32 %v1367, %v66
    %v1384 = vadd.f32 %v1368, %v66
    %v1385 = vadd.f32 %v1369, %v66
    %v1386 = vsel %vm103, %v1378, -inf
    %1387 = vmax.xlane.f32.xlu0 %v1386
    %v1388 = vpop.xlane.xlu0 %1387
    %v1389 = vsel %vm103, %v1379, -inf
    %1390 = vmax.xlane.f32.xlu0 %v1389
    %v1391 = vpop.xlane.xlu0 %1390
    %v1392 = vsel %vm103, %v1380, -inf
    %1393 = vmax.xlane.f32.xlu0 %v1392
    %v1394 = vpop.xlane.xlu0 %1393
    %v1395 = vsel %vm103, %v1381, -inf
    %1396 = vmax.xlane.f32.xlu0 %v1395
    %v1397 = vpop.xlane.xlu0 %1396
    %v1398 = vsel %vm103, %v1382, -inf
    %1399 = vmax.xlane.f32.xlu0 %v1398
    %v1400 = vpop.xlane.xlu0 %1399
    %v1401 = vsel %vm103, %v1383, -inf
    %1402 = vmax.xlane.f32.xlu0 %v1401
    %v1403 = vpop.xlane.xlu0 %1402
    %v1404 = vsel %vm103, %v1384, -inf
    %1405 = vmax.xlane.f32.xlu0 %v1404
    %v1406 = vpop.xlane.xlu0 %1405
    %v1407 = vsel %vm103, %v1385, -inf
    %1408 = vmax.xlane.f32.xlu0 %v1407
    %v1409 = vpop.xlane.xlu0 %1408
    %v1410 = vsub.f32 %v1378, %v1388
    %v1411 = vsub.f32 %v1379, %v1391
    %v1412 = vsub.f32 %v1380, %v1394
    %v1413 = vsub.f32 %v1381, %v1397
    %v1414 = vsub.f32 %v1382, %v1400
    %v1415 = vsub.f32 %v1383, %v1403
    %v1416 = vsub.f32 %v1384, %v1406
    %v1417 = vsub.f32 %v1385, %v1409
    %v1418 = vmul.f32 %v1410, 1.442695
    %v1419 = vpow.pop %v1418
    %v1420 = vmul.f32 %v1411, 1.442695
    %v1421 = vpow.pop %v1420
    %v1422 = vmul.f32 %v1412, 1.442695
    %v1423 = vpow.pop %v1422
    %v1424 = vmul.f32 %v1413, 1.442695
    %v1425 = vpow.pop %v1424
    %v1426 = vmul.f32 %v1414, 1.442695
    %v1427 = vpow.pop %v1426
    %v1428 = vmul.f32 %v1415, 1.442695
    %v1429 = vpow.pop %v1428
    %v1430 = vmul.f32 %v1416, 1.442695
    %v1431 = vpow.pop %v1430
    %v1432 = vmul.f32 %v1417, 1.442695
    %v1433 = vpow.pop %v1432
    %v1434 = vsel %vm103, %v1419, 0.0
    %1435 = vadd.xlane.f32.xlu0 %v1434
    %v1436 = vpop.xlane.xlu0 %1435
    %v1437 = vsel %vm103, %v1421, 0.0
    %1438 = vadd.xlane.f32.xlu0 %v1437
    %v1439 = vpop.xlane.xlu0 %1438
    %v1440 = vsel %vm103, %v1423, 0.0
    %1441 = vadd.xlane.f32.xlu0 %v1440
    %v1442 = vpop.xlane.xlu0 %1441
    %v1443 = vsel %vm103, %v1425, 0.0
    %1444 = vadd.xlane.f32.xlu0 %v1443
    %v1445 = vpop.xlane.xlu0 %1444
    %v1446 = vsel %vm103, %v1427, 0.0
    %1447 = vadd.xlane.f32.xlu0 %v1446
    %v1448 = vpop.xlane.xlu0 %1447
    %v1449 = vsel %vm103, %v1429, 0.0
    %1450 = vadd.xlane.f32.xlu0 %v1449
    %v1451 = vpop.xlane.xlu0 %1450
    %v1452 = vsel %vm103, %v1431, 0.0
    %1453 = vadd.xlane.f32.xlu0 %v1452
    %v1454 = vpop.xlane.xlu0 %1453
    %v1455 = vsel %vm103, %v1433, 0.0
    %1456 = vadd.xlane.f32.xlu0 %v1455
    %v1457 = vpop.xlane.xlu0 %1456
    %v1458 = vlog2.pop %v1436
    %v1459 = vmul.f32 %v1458, 0.6931472
    %v1460 = vlog2.pop %v1439
    %v1461 = vmul.f32 %v1460, 0.6931472
    %v1462 = vlog2.pop %v1442
    %v1463 = vmul.f32 %v1462, 0.6931472
    %v1464 = vlog2.pop %v1445
    %v1465 = vmul.f32 %v1464, 0.6931472
    %v1466 = vlog2.pop %v1448
    %v1467 = vmul.f32 %v1466, 0.6931472
    %v1468 = vlog2.pop %v1451
    %v1469 = vmul.f32 %v1468, 0.6931472
    %v1470 = vlog2.pop %v1454
    %v1471 = vmul.f32 %v1470, 0.6931472
    %v1472 = vlog2.pop %v1457
    %v1473 = vmul.f32 %v1472, 0.6931472
    %v1474 = vadd.f32 %v1388, %v1459
    %v1475 = vadd.f32 %v1391, %v1461
    %v1476 = vadd.f32 %v1394, %v1463
    %v1477 = vadd.f32 %v1397, %v1465
    %v1478 = vadd.f32 %v1400, %v1467
    %v1479 = vadd.f32 %v1403, %v1469
    %v1480 = vadd.f32 %v1406, %v1471
    %v1481 = vadd.f32 %v1409, %v1473
    %v1482 = vperm.slane %v57, 5
    %v1483 = vlaneseq
    %v1484 = vshrl.u32 %v1483, 7
    %1486 = vset.pattern.permute.xlu0 %v1484
    %1487 = vperm.xlu0 %1486, %v1482
    %v1488 = vpop.permute.xlu0 %1487
    %v1489 = vperm.slane %v58, 5
    %v1490 = vlaneseq
    %v1491 = vshrl.u32 %v1490, 7
    %1493 = vset.pattern.permute.xlu0 %v1491
    %1494 = vperm.xlu0 %1493, %v1489
    %v1495 = vpop.permute.xlu0 %1494
    %v1496 = vperm.slane %v59, 5
    %v1497 = vlaneseq
    %v1498 = vshrl.u32 %v1497, 7
    %1500 = vset.pattern.permute.xlu0 %v1498
    %1501 = vperm.xlu0 %1500, %v1496
    %v1502 = vpop.permute.xlu0 %1501
    %v1503 = vperm.slane %v60, 5
    %v1504 = vlaneseq
    %v1505 = vshrl.u32 %v1504, 7
    %1507 = vset.pattern.permute.xlu0 %v1505
    %1508 = vperm.xlu0 %1507, %v1503
    %v1509 = vpop.permute.xlu0 %1508
    %v1510 = vperm.slane %v61, 5
    %v1511 = vlaneseq
    %v1512 = vshrl.u32 %v1511, 7
    %1514 = vset.pattern.permute.xlu0 %v1512
    %1515 = vperm.xlu0 %1514, %v1510
    %v1516 = vpop.permute.xlu0 %1515
    %v1517 = vperm.slane %v62, 5
    %v1518 = vlaneseq
    %v1519 = vshrl.u32 %v1518, 7
    %1521 = vset.pattern.permute.xlu0 %v1519
    %1522 = vperm.xlu0 %1521, %v1517
    %v1523 = vpop.permute.xlu0 %1522
    %v1524 = vperm.slane %v63, 5
    %v1525 = vlaneseq
    %v1526 = vshrl.u32 %v1525, 7
    %1528 = vset.pattern.permute.xlu0 %v1526
    %1529 = vperm.xlu0 %1528, %v1524
    %v1530 = vpop.permute.xlu0 %1529
    %v1531 = vperm.slane %v64, 5
    %v1532 = vlaneseq
    %v1533 = vshrl.u32 %v1532, 7
    %1535 = vset.pattern.permute.xlu0 %v1533
    %1536 = vperm.xlu0 %1535, %v1531
    %v1537 = vpop.permute.xlu0 %1536
    %v1546 = vadd.f32 %v1474, %v1488
    %v1547 = vadd.f32 %v1475, %v1495
    %v1548 = vadd.f32 %v1476, %v1502
    %v1549 = vadd.f32 %v1477, %v1509
    %v1550 = vadd.f32 %v1478, %v1516
    %v1551 = vadd.f32 %v1479, %v1523
    %v1552 = vadd.f32 %v1480, %v1530
    %v1553 = vadd.f32 %v1481, %v1537
    %1554 = vset.pattern.permute.xlu0 5
    %1555 = vperm.xlu0 %1554, %v281
    %v1556 = vpop.permute.xlu0 %1555
    %vm1557 = vcmp.eq.s32.totalorder %v1556, 1
    %1566 = vset.pattern.permute.xlu0 0
    %1567 = vperm.xlu0 %1566, %v1546
    %v1568 = vpop.permute.xlu0 %1567
    %1569 = vset.pattern.permute.xlu0 0
    %1570 = vperm.xlu0 %1569, %v1547
    %v1571 = vpop.permute.xlu0 %1570
    %1572 = vset.pattern.permute.xlu0 0
    %1573 = vperm.xlu0 %1572, %v1548
    %v1574 = vpop.permute.xlu0 %1573
    %1575 = vset.pattern.permute.xlu0 0
    %1576 = vperm.xlu0 %1575, %v1549
    %v1577 = vpop.permute.xlu0 %1576
    %1578 = vset.pattern.permute.xlu0 0
    %1579 = vperm.xlu0 %1578, %v1550
    %v1580 = vpop.permute.xlu0 %1579
    %1581 = vset.pattern.permute.xlu0 0
    %1582 = vperm.xlu0 %1581, %v1551
    %v1583 = vpop.permute.xlu0 %1582
    %1584 = vset.pattern.permute.xlu0 0
    %1585 = vperm.xlu0 %1584, %v1552
    %v1586 = vpop.permute.xlu0 %1585
    %1587 = vset.pattern.permute.xlu0 0
    %1588 = vperm.xlu0 %1587, %v1553
    %v1589 = vpop.permute.xlu0 %1588
    %v1590 = vperm.slane %v1568, %v68
    %v1591 = vperm.slane %v1571, %v68
    %v1592 = vperm.slane %v1574, %v68
    %v1593 = vperm.slane %v1577, %v68
    %v1594 = vperm.slane %v1580, %v68
    %v1595 = vperm.slane %v1583, %v68
    %v1596 = vperm.slane %v1586, %v68
    %v1597 = vperm.slane %v1589, %v68
    %v1598 = vsel %vm326, %v1591, %v1590
    %v1599 = vsel %vm328, %v1592, %v1598
    %v1600 = vsel %vm330, %v1593, %v1599
    %v1601 = vsel %vm332, %v1594, %v1600
    %v1602 = vsel %vm334, %v1595, %v1601
    %v1603 = vsel %vm336, %v1596, %v1602
    %v1604 = vsel %vm338, %v1597, %v1603
    %v1606 = vsel %vm1557, %v1604, %v1353
    %v1608 = vrot.slane %v1606, 1
    %v1609 = vrot.slane %v1606, 2
    %v1610 = vrot.slane %v1606, 3
    %v1611 = vrot.slane %v1606, 4
    %v1612 = vrot.slane %v1606, 5
    %v1613 = vrot.slane %v1606, 6
    %v1614 = vrot.slane %v1606, 7
    %v1615 = vperm.slane %v1606, 0
    %v1616 = vperm.slane %v1608, 0
    %v1617 = vperm.slane %v1609, 0
    %v1618 = vperm.slane %v1610, 0
    %v1619 = vperm.slane %v1611, 0
    %v1620 = vperm.slane %v1612, 0
    %v1621 = vperm.slane %v1613, 0
    %v1622 = vperm.slane %v1614, 0
    %v1631 = vadd.f32 %v1615, %v66
    %v1632 = vadd.f32 %v1616, %v66
    %v1633 = vadd.f32 %v1617, %v66
    %v1634 = vadd.f32 %v1618, %v66
    %v1635 = vadd.f32 %v1619, %v66
    %v1636 = vadd.f32 %v1620, %v66
    %v1637 = vadd.f32 %v1621, %v66
    %v1638 = vadd.f32 %v1622, %v66
    %v1639 = vsel %vm103, %v1631, -inf
    %1640 = vmax.xlane.f32.xlu0 %v1639
    %v1641 = vpop.xlane.xlu0 %1640
    %v1642 = vsel %vm103, %v1632, -inf
    %1643 = vmax.xlane.f32.xlu0 %v1642
    %v1644 = vpop.xlane.xlu0 %1643
    %v1645 = vsel %vm103, %v1633, -inf
    %1646 = vmax.xlane.f32.xlu0 %v1645
    %v1647 = vpop.xlane.xlu0 %1646
    %v1648 = vsel %vm103, %v1634, -inf
    %1649 = vmax.xlane.f32.xlu0 %v1648
    %v1650 = vpop.xlane.xlu0 %1649
    %v1651 = vsel %vm103, %v1635, -inf
    %1652 = vmax.xlane.f32.xlu0 %v1651
    %v1653 = vpop.xlane.xlu0 %1652
    %v1654 = vsel %vm103, %v1636, -inf
    %1655 = vmax.xlane.f32.xlu0 %v1654
    %v1656 = vpop.xlane.xlu0 %1655
    %v1657 = vsel %vm103, %v1637, -inf
    %1658 = vmax.xlane.f32.xlu0 %v1657
    %v1659 = vpop.xlane.xlu0 %1658
    %v1660 = vsel %vm103, %v1638, -inf
    %1661 = vmax.xlane.f32.xlu0 %v1660
    %v1662 = vpop.xlane.xlu0 %1661
    %v1663 = vsub.f32 %v1631, %v1641
    %v1664 = vsub.f32 %v1632, %v1644
    %v1665 = vsub.f32 %v1633, %v1647
    %v1666 = vsub.f32 %v1634, %v1650
    %v1667 = vsub.f32 %v1635, %v1653
    %v1668 = vsub.f32 %v1636, %v1656
    %v1669 = vsub.f32 %v1637, %v1659
    %v1670 = vsub.f32 %v1638, %v1662
    %v1671 = vmul.f32 %v1663, 1.442695
    %v1672 = vpow.pop %v1671
    %v1673 = vmul.f32 %v1664, 1.442695
    %v1674 = vpow.pop %v1673
    %v1675 = vmul.f32 %v1665, 1.442695
    %v1676 = vpow.pop %v1675
    %v1677 = vmul.f32 %v1666, 1.442695
    %v1678 = vpow.pop %v1677
    %v1679 = vmul.f32 %v1667, 1.442695
    %v1680 = vpow.pop %v1679
    %v1681 = vmul.f32 %v1668, 1.442695
    %v1682 = vpow.pop %v1681
    %v1683 = vmul.f32 %v1669, 1.442695
    %v1684 = vpow.pop %v1683
    %v1685 = vmul.f32 %v1670, 1.442695
    %v1686 = vpow.pop %v1685
    %v1687 = vsel %vm103, %v1672, 0.0
    %1688 = vadd.xlane.f32.xlu0 %v1687
    %v1689 = vpop.xlane.xlu0 %1688
    %v1690 = vsel %vm103, %v1674, 0.0
    %1691 = vadd.xlane.f32.xlu0 %v1690
    %v1692 = vpop.xlane.xlu0 %1691
    %v1693 = vsel %vm103, %v1676, 0.0
    %1694 = vadd.xlane.f32.xlu0 %v1693
    %v1695 = vpop.xlane.xlu0 %1694
    %v1696 = vsel %vm103, %v1678, 0.0
    %1697 = vadd.xlane.f32.xlu0 %v1696
    %v1698 = vpop.xlane.xlu0 %1697
    %v1699 = vsel %vm103, %v1680, 0.0
    %1700 = vadd.xlane.f32.xlu0 %v1699
    %v1701 = vpop.xlane.xlu0 %1700
    %v1702 = vsel %vm103, %v1682, 0.0
    %1703 = vadd.xlane.f32.xlu0 %v1702
    %v1704 = vpop.xlane.xlu0 %1703
    %v1705 = vsel %vm103, %v1684, 0.0
    %1706 = vadd.xlane.f32.xlu0 %v1705
    %v1707 = vpop.xlane.xlu0 %1706
    %v1708 = vsel %vm103, %v1686, 0.0
    %1709 = vadd.xlane.f32.xlu0 %v1708
    %v1710 = vpop.xlane.xlu0 %1709
    %v1711 = vlog2.pop %v1689
    %v1712 = vmul.f32 %v1711, 0.6931472
    %v1713 = vlog2.pop %v1692
    %v1714 = vmul.f32 %v1713, 0.6931472
    %v1715 = vlog2.pop %v1695
    %v1716 = vmul.f32 %v1715, 0.6931472
    %v1717 = vlog2.pop %v1698
    %v1718 = vmul.f32 %v1717, 0.6931472
    %v1719 = vlog2.pop %v1701
    %v1720 = vmul.f32 %v1719, 0.6931472
    %v1721 = vlog2.pop %v1704
    %v1722 = vmul.f32 %v1721, 0.6931472
    %v1723 = vlog2.pop %v1707
    %v1724 = vmul.f32 %v1723, 0.6931472
    %v1725 = vlog2.pop %v1710
    %v1726 = vmul.f32 %v1725, 0.6931472
    %v1727 = vadd.f32 %v1641, %v1712
    %v1728 = vadd.f32 %v1644, %v1714
    %v1729 = vadd.f32 %v1647, %v1716
    %v1730 = vadd.f32 %v1650, %v1718
    %v1731 = vadd.f32 %v1653, %v1720
    %v1732 = vadd.f32 %v1656, %v1722
    %v1733 = vadd.f32 %v1659, %v1724
    %v1734 = vadd.f32 %v1662, %v1726
    %v1735 = vperm.slane %v57, 6
    %v1736 = vlaneseq
    %v1737 = vshrl.u32 %v1736, 7
    %1739 = vset.pattern.permute.xlu0 %v1737
    %1740 = vperm.xlu0 %1739, %v1735
    %v1741 = vpop.permute.xlu0 %1740
    %v1742 = vperm.slane %v58, 6
    %v1743 = vlaneseq
    %v1744 = vshrl.u32 %v1743, 7
    %1746 = vset.pattern.permute.xlu0 %v1744
    %1747 = vperm.xlu0 %1746, %v1742
    %v1748 = vpop.permute.xlu0 %1747
    %v1749 = vperm.slane %v59, 6
    %v1750 = vlaneseq
    %v1751 = vshrl.u32 %v1750, 7
    %1753 = vset.pattern.permute.xlu0 %v1751
    %1754 = vperm.xlu0 %1753, %v1749
    %v1755 = vpop.permute.xlu0 %1754
    %v1756 = vperm.slane %v60, 6
    %v1757 = vlaneseq
    %v1758 = vshrl.u32 %v1757, 7
    %1760 = vset.pattern.permute.xlu0 %v1758
    %1761 = vperm.xlu0 %1760, %v1756
    %v1762 = vpop.permute.xlu0 %1761
    %v1763 = vperm.slane %v61, 6
    %v1764 = vlaneseq
    %v1765 = vshrl.u32 %v1764, 7
    %1767 = vset.pattern.permute.xlu0 %v1765
    %1768 = vperm.xlu0 %1767, %v1763
    %v1769 = vpop.permute.xlu0 %1768
    %v1770 = vperm.slane %v62, 6
    %v1771 = vlaneseq
    %v1772 = vshrl.u32 %v1771, 7
    %1774 = vset.pattern.permute.xlu0 %v1772
    %1775 = vperm.xlu0 %1774, %v1770
    %v1776 = vpop.permute.xlu0 %1775
    %v1777 = vperm.slane %v63, 6
    %v1778 = vlaneseq
    %v1779 = vshrl.u32 %v1778, 7
    %1781 = vset.pattern.permute.xlu0 %v1779
    %1782 = vperm.xlu0 %1781, %v1777
    %v1783 = vpop.permute.xlu0 %1782
    %v1784 = vperm.slane %v64, 6
    %v1785 = vlaneseq
    %v1786 = vshrl.u32 %v1785, 7
    %1788 = vset.pattern.permute.xlu0 %v1786
    %1789 = vperm.xlu0 %1788, %v1784
    %v1790 = vpop.permute.xlu0 %1789
    %v1799 = vadd.f32 %v1727, %v1741
    %v1800 = vadd.f32 %v1728, %v1748
    %v1801 = vadd.f32 %v1729, %v1755
    %v1802 = vadd.f32 %v1730, %v1762
    %v1803 = vadd.f32 %v1731, %v1769
    %v1804 = vadd.f32 %v1732, %v1776
    %v1805 = vadd.f32 %v1733, %v1783
    %v1806 = vadd.f32 %v1734, %v1790
    %1807 = vset.pattern.permute.xlu0 6
    %1808 = vperm.xlu0 %1807, %v281
    %v1809 = vpop.permute.xlu0 %1808
    %vm1810 = vcmp.eq.s32.totalorder %v1809, 1
    %1819 = vset.pattern.permute.xlu0 0
    %1820 = vperm.xlu0 %1819, %v1799
    %v1821 = vpop.permute.xlu0 %1820
    %1822 = vset.pattern.permute.xlu0 0
    %1823 = vperm.xlu0 %1822, %v1800
    %v1824 = vpop.permute.xlu0 %1823
    %1825 = vset.pattern.permute.xlu0 0
    %1826 = vperm.xlu0 %1825, %v1801
    %v1827 = vpop.permute.xlu0 %1826
    %1828 = vset.pattern.permute.xlu0 0
    %1829 = vperm.xlu0 %1828, %v1802
    %v1830 = vpop.permute.xlu0 %1829
    %1831 = vset.pattern.permute.xlu0 0
    %1832 = vperm.xlu0 %1831, %v1803
    %v1833 = vpop.permute.xlu0 %1832
    %1834 = vset.pattern.permute.xlu0 0
    %1835 = vperm.xlu0 %1834, %v1804
    %v1836 = vpop.permute.xlu0 %1835
    %1837 = vset.pattern.permute.xlu0 0
    %1838 = vperm.xlu0 %1837, %v1805
    %v1839 = vpop.permute.xlu0 %1838
    %1840 = vset.pattern.permute.xlu0 0
    %1841 = vperm.xlu0 %1840, %v1806
    %v1842 = vpop.permute.xlu0 %1841
    %v1843 = vperm.slane %v1821, %v68
    %v1844 = vperm.slane %v1824, %v68
    %v1845 = vperm.slane %v1827, %v68
    %v1846 = vperm.slane %v1830, %v68
    %v1847 = vperm.slane %v1833, %v68
    %v1848 = vperm.slane %v1836, %v68
    %v1849 = vperm.slane %v1839, %v68
    %v1850 = vperm.slane %v1842, %v68
    %v1851 = vsel %vm326, %v1844, %v1843
    %v1852 = vsel %vm328, %v1845, %v1851
    %v1853 = vsel %vm330, %v1846, %v1852
    %v1854 = vsel %vm332, %v1847, %v1853
    %v1855 = vsel %vm334, %v1848, %v1854
    %v1856 = vsel %vm336, %v1849, %v1855
    %v1857 = vsel %vm338, %v1850, %v1856
    %v1859 = vsel %vm1810, %v1857, %v1606
    %v1861 = vrot.slane %v1859, 1
    %v1862 = vrot.slane %v1859, 2
    %v1863 = vrot.slane %v1859, 3
    %v1864 = vrot.slane %v1859, 4
    %v1865 = vrot.slane %v1859, 5
    %v1866 = vrot.slane %v1859, 6
    %v1867 = vrot.slane %v1859, 7
    %v1868 = vperm.slane %v1859, 0
    %v1869 = vperm.slane %v1861, 0
    %v1870 = vperm.slane %v1862, 0
    %v1871 = vperm.slane %v1863, 0
    %v1872 = vperm.slane %v1864, 0
    %v1873 = vperm.slane %v1865, 0
    %v1874 = vperm.slane %v1866, 0
    %v1875 = vperm.slane %v1867, 0
    %v1884 = vadd.f32 %v1868, %v66
    %v1885 = vadd.f32 %v1869, %v66
    %v1886 = vadd.f32 %v1870, %v66
    %v1887 = vadd.f32 %v1871, %v66
    %v1888 = vadd.f32 %v1872, %v66
    %v1889 = vadd.f32 %v1873, %v66
    %v1890 = vadd.f32 %v1874, %v66
    %v1891 = vadd.f32 %v1875, %v66
    %v1892 = vsel %vm103, %v1884, -inf
    %1893 = vmax.xlane.f32.xlu0 %v1892
    %v1894 = vpop.xlane.xlu0 %1893
    %v1895 = vsel %vm103, %v1885, -inf
    %1896 = vmax.xlane.f32.xlu0 %v1895
    %v1897 = vpop.xlane.xlu0 %1896
    %v1898 = vsel %vm103, %v1886, -inf
    %1899 = vmax.xlane.f32.xlu0 %v1898
    %v1900 = vpop.xlane.xlu0 %1899
    %v1901 = vsel %vm103, %v1887, -inf
    %1902 = vmax.xlane.f32.xlu0 %v1901
    %v1903 = vpop.xlane.xlu0 %1902
    %v1904 = vsel %vm103, %v1888, -inf
    %1905 = vmax.xlane.f32.xlu0 %v1904
    %v1906 = vpop.xlane.xlu0 %1905
    %v1907 = vsel %vm103, %v1889, -inf
    %1908 = vmax.xlane.f32.xlu0 %v1907
    %v1909 = vpop.xlane.xlu0 %1908
    %v1910 = vsel %vm103, %v1890, -inf
    %1911 = vmax.xlane.f32.xlu0 %v1910
    %v1912 = vpop.xlane.xlu0 %1911
    %v1913 = vsel %vm103, %v1891, -inf
    %1914 = vmax.xlane.f32.xlu0 %v1913
    %v1915 = vpop.xlane.xlu0 %1914
    %v1916 = vsub.f32 %v1884, %v1894
    %v1917 = vsub.f32 %v1885, %v1897
    %v1918 = vsub.f32 %v1886, %v1900
    %v1919 = vsub.f32 %v1887, %v1903
    %v1920 = vsub.f32 %v1888, %v1906
    %v1921 = vsub.f32 %v1889, %v1909
    %v1922 = vsub.f32 %v1890, %v1912
    %v1923 = vsub.f32 %v1891, %v1915
    %v1924 = vmul.f32 %v1916, 1.442695
    %v1925 = vpow.pop %v1924
    %v1926 = vmul.f32 %v1917, 1.442695
    %v1927 = vpow.pop %v1926
    %v1928 = vmul.f32 %v1918, 1.442695
    %v1929 = vpow.pop %v1928
    %v1930 = vmul.f32 %v1919, 1.442695
    %v1931 = vpow.pop %v1930
    %v1932 = vmul.f32 %v1920, 1.442695
    %v1933 = vpow.pop %v1932
    %v1934 = vmul.f32 %v1921, 1.442695
    %v1935 = vpow.pop %v1934
    %v1936 = vmul.f32 %v1922, 1.442695
    %v1937 = vpow.pop %v1936
    %v1938 = vmul.f32 %v1923, 1.442695
    %v1939 = vpow.pop %v1938
    %v1940 = vsel %vm103, %v1925, 0.0
    %1941 = vadd.xlane.f32.xlu0 %v1940
    %v1942 = vpop.xlane.xlu0 %1941
    %v1943 = vsel %vm103, %v1927, 0.0
    %1944 = vadd.xlane.f32.xlu0 %v1943
    %v1945 = vpop.xlane.xlu0 %1944
    %v1946 = vsel %vm103, %v1929, 0.0
    %1947 = vadd.xlane.f32.xlu0 %v1946
    %v1948 = vpop.xlane.xlu0 %1947
    %v1949 = vsel %vm103, %v1931, 0.0
    %1950 = vadd.xlane.f32.xlu0 %v1949
    %v1951 = vpop.xlane.xlu0 %1950
    %v1952 = vsel %vm103, %v1933, 0.0
    %1953 = vadd.xlane.f32.xlu0 %v1952
    %v1954 = vpop.xlane.xlu0 %1953
    %v1955 = vsel %vm103, %v1935, 0.0
    %1956 = vadd.xlane.f32.xlu0 %v1955
    %v1957 = vpop.xlane.xlu0 %1956
    %v1958 = vsel %vm103, %v1937, 0.0
    %1959 = vadd.xlane.f32.xlu0 %v1958
    %v1960 = vpop.xlane.xlu0 %1959
    %v1961 = vsel %vm103, %v1939, 0.0
    %1962 = vadd.xlane.f32.xlu0 %v1961
    %v1963 = vpop.xlane.xlu0 %1962
    %v1964 = vlog2.pop %v1942
    %v1965 = vmul.f32 %v1964, 0.6931472
    %v1966 = vlog2.pop %v1945
    %v1967 = vmul.f32 %v1966, 0.6931472
    %v1968 = vlog2.pop %v1948
    %v1969 = vmul.f32 %v1968, 0.6931472
    %v1970 = vlog2.pop %v1951
    %v1971 = vmul.f32 %v1970, 0.6931472
    %v1972 = vlog2.pop %v1954
    %v1973 = vmul.f32 %v1972, 0.6931472
    %v1974 = vlog2.pop %v1957
    %v1975 = vmul.f32 %v1974, 0.6931472
    %v1976 = vlog2.pop %v1960
    %v1977 = vmul.f32 %v1976, 0.6931472
    %v1978 = vlog2.pop %v1963
    %v1979 = vmul.f32 %v1978, 0.6931472
    %v1980 = vadd.f32 %v1894, %v1965
    %v1981 = vadd.f32 %v1897, %v1967
    %v1982 = vadd.f32 %v1900, %v1969
    %v1983 = vadd.f32 %v1903, %v1971
    %v1984 = vadd.f32 %v1906, %v1973
    %v1985 = vadd.f32 %v1909, %v1975
    %v1986 = vadd.f32 %v1912, %v1977
    %v1987 = vadd.f32 %v1915, %v1979
    %v1988 = vperm.slane %v57, 7
    %v1989 = vlaneseq
    %v1990 = vshrl.u32 %v1989, 7
    %1992 = vset.pattern.permute.xlu0 %v1990
    %1993 = vperm.xlu0 %1992, %v1988
    %v1994 = vpop.permute.xlu0 %1993
    %v1995 = vperm.slane %v58, 7
    %v1996 = vlaneseq
    %v1997 = vshrl.u32 %v1996, 7
    %1999 = vset.pattern.permute.xlu0 %v1997
    %2000 = vperm.xlu0 %1999, %v1995
    %v2001 = vpop.permute.xlu0 %2000
    %v2002 = vperm.slane %v59, 7
    %v2003 = vlaneseq
    %v2004 = vshrl.u32 %v2003, 7
    %2006 = vset.pattern.permute.xlu0 %v2004
    %2007 = vperm.xlu0 %2006, %v2002
    %v2008 = vpop.permute.xlu0 %2007
    %v2009 = vperm.slane %v60, 7
    %v2010 = vlaneseq
    %v2011 = vshrl.u32 %v2010, 7
    %2013 = vset.pattern.permute.xlu0 %v2011
    %2014 = vperm.xlu0 %2013, %v2009
    %v2015 = vpop.permute.xlu0 %2014
    %v2016 = vperm.slane %v61, 7
    %v2017 = vlaneseq
    %v2018 = vshrl.u32 %v2017, 7
    %2020 = vset.pattern.permute.xlu0 %v2018
    %2021 = vperm.xlu0 %2020, %v2016
    %v2022 = vpop.permute.xlu0 %2021
    %v2023 = vperm.slane %v62, 7
    %v2024 = vlaneseq
    %v2025 = vshrl.u32 %v2024, 7
    %2027 = vset.pattern.permute.xlu0 %v2025
    %2028 = vperm.xlu0 %2027, %v2023
    %v2029 = vpop.permute.xlu0 %2028
    %v2030 = vperm.slane %v63, 7
    %v2031 = vlaneseq
    %v2032 = vshrl.u32 %v2031, 7
    %2034 = vset.pattern.permute.xlu0 %v2032
    %2035 = vperm.xlu0 %2034, %v2030
    %v2036 = vpop.permute.xlu0 %2035
    %v2037 = vperm.slane %v64, 7
    %v2038 = vlaneseq
    %v2039 = vshrl.u32 %v2038, 7
    %2041 = vset.pattern.permute.xlu0 %v2039
    %2042 = vperm.xlu0 %2041, %v2037
    %v2043 = vpop.permute.xlu0 %2042
    %v2052 = vadd.f32 %v1980, %v1994
    %v2053 = vadd.f32 %v1981, %v2001
    %v2054 = vadd.f32 %v1982, %v2008
    %v2055 = vadd.f32 %v1983, %v2015
    %v2056 = vadd.f32 %v1984, %v2022
    %v2057 = vadd.f32 %v1985, %v2029
    %v2058 = vadd.f32 %v1986, %v2036
    %v2059 = vadd.f32 %v1987, %v2043
    %2060 = vset.pattern.permute.xlu0 7
    %2061 = vperm.xlu0 %2060, %v281
    %v2062 = vpop.permute.xlu0 %2061
    %vm2063 = vcmp.eq.s32.totalorder %v2062, 1
    %2072 = vset.pattern.permute.xlu0 0
    %2073 = vperm.xlu0 %2072, %v2052
    %v2074 = vpop.permute.xlu0 %2073
    %2075 = vset.pattern.permute.xlu0 0
    %2076 = vperm.xlu0 %2075, %v2053
    %v2077 = vpop.permute.xlu0 %2076
    %2078 = vset.pattern.permute.xlu0 0
    %2079 = vperm.xlu0 %2078, %v2054
    %v2080 = vpop.permute.xlu0 %2079
    %2081 = vset.pattern.permute.xlu0 0
    %2082 = vperm.xlu0 %2081, %v2055
    %v2083 = vpop.permute.xlu0 %2082
    %2084 = vset.pattern.permute.xlu0 0
    %2085 = vperm.xlu0 %2084, %v2056
    %v2086 = vpop.permute.xlu0 %2085
    %2087 = vset.pattern.permute.xlu0 0
    %2088 = vperm.xlu0 %2087, %v2057
    %v2089 = vpop.permute.xlu0 %2088
    %2090 = vset.pattern.permute.xlu0 0
    %2091 = vperm.xlu0 %2090, %v2058
    %v2092 = vpop.permute.xlu0 %2091
    %2093 = vset.pattern.permute.xlu0 0
    %2094 = vperm.xlu0 %2093, %v2059
    %v2095 = vpop.permute.xlu0 %2094
    %v2096 = vperm.slane %v2074, %v68
    %v2097 = vperm.slane %v2077, %v68
    %v2098 = vperm.slane %v2080, %v68
    %v2099 = vperm.slane %v2083, %v68
    %v2100 = vperm.slane %v2086, %v68
    %v2101 = vperm.slane %v2089, %v68
    %v2102 = vperm.slane %v2092, %v68
    %v2103 = vperm.slane %v2095, %v68
    %v2104 = vsel %vm326, %v2097, %v2096
    %v2105 = vsel %vm328, %v2098, %v2104
    %v2106 = vsel %vm330, %v2099, %v2105
    %v2107 = vsel %vm332, %v2100, %v2106
    %v2108 = vsel %vm334, %v2101, %v2107
    %v2109 = vsel %vm336, %v2102, %v2108
    %v2110 = vsel %vm338, %v2103, %v2109
    %v2112 = vsel %vm2063, %v2110, %v1859
    %v2113 = vperm.slane %v66, 2
    %v2114 = vadd.f32 %v2112, %v2113
    %v2115 = vsel %vm103, %v2114, -inf
    %2116 = vmax.xlane.f32.xlu0 %v2115
    %v2117 = vpop.xlane.xlu0 %2116
    %v2118 = vsub.f32 %v2114, %v2117
    %v2119 = vmul.f32 %v2118, 1.442695
    %v2120 = vpow.pop %v2119
    %v2121 = vsel %vm103, %v2120, 0.0
    %2122 = vadd.xlane.f32.xlu0 %v2121
    %v2123 = vpop.xlane.xlu0 %2122
    %v2124 = vlog2.pop %v2123
    %v2125 = vmul.f32 %v2124, 0.6931472
    %v2126 = vadd.f32 %v2117, %v2125
    %vm2127 = vcmask 7168
    %2128 = vst.msk [vmem:[%s3] sm:$0xff] %vm2127, %v2126
    // Predicated region
    $region26: #{tpu_custom_call.1} parent=1 // pred_check
      _
    $region27: #{tpu_custom_call.1} parent=1 // pred_check_branch
      %2130 = sbr.rel (0) target = $region29
    $region28: #{tpu_custom_call.1} parent=1 // pred_region
      _
    $region29: #{tpu_custom_call.1} parent=1 // pred_fallthru
      _
    // Predicated region
    $region30: #{tpu_custom_call.1} parent=1 // pred_check
      _
    $region31: #{tpu_custom_call.1} parent=1 // pred_check_branch
      %2132 = sbr.rel (0) target = $region33
    $region32: #{tpu_custom_call.1} parent=1 // pred_region
      _
    $region33: #{tpu_custom_call.1} parent=1 // pred_fallthru
      _
    %2133 = vsyncpa [#allocation3], 1
    %2134 = vsyncpa [#allocation5], 1

</llo_original>
